<compile_context>
chip_gen: v6e
topology: v6e:2x2x1
jax: 0.10.0
libtpu: 0.0.40
codegen_flags: <defaults>
</compile_context>

<pallas_src>
import math

import jax
import jax.numpy as jnp
from jax.experimental import pallas as pl
from jax.experimental.pallas import tpu as pltpu

N_BIG_FIVE = 5
N_DARK_TRIAD = 3
OUT_PAD = 128          # lane-dense packed output width
LN_EPS = 1e-5


def _fused_heads_kernel(ids_ref,                      # [B_pad] int32, SMEM (scalar prefetch)
                        emb_ref,                      # [VOCAB, H] f32, HBM (pl.ANY)
                        g5_ref, be5_ref, w15_ref, b15_ref, w2p5_ref,
                        gd_ref, bed_ref, w1d_ref, b1d_ref, w2pd_ref,
                        b2p_ref,
                        o_ref,                        # [B_pad, OUT_PAD] f32
                        pooled_ref,                   # scratch VMEM [B_pad, H] f32
                        sems):                        # DMA sems [B_pad]
    n_rows = pooled_ref.shape[0]

    # In-kernel CLS gather: one small row DMA per batch element, all in flight
    # simultaneously (scalar ids read before any .wait()).
    copies = []
    for b in range(n_rows):
        cp = pltpu.make_async_copy(
            emb_ref.at[pl.ds(ids_ref[b], 1), :],
            pooled_ref.at[pl.ds(b, 1), :],
            sems.at[b],
        )
        cp.start()
        copies.append(cp)
    for cp in copies:
        cp.wait()

    x = pooled_ref[...]                               # [B_pad, H] f32

    # Shared LayerNorm statistics (each head applies its own affine), f32 math.
    mu = jnp.mean(x, axis=-1, keepdims=True)
    var = jnp.mean(jnp.square(x - mu), axis=-1, keepdims=True)
    xn = (x - mu) * jax.lax.rsqrt(var + LN_EPS)

    def head(g_ref, be_ref, w1_ref, b1_ref, w2p_ref):
        xh = xn * g_ref[...] + be_ref[...]            # f32 affine
        h = jnp.dot(xh.astype(jnp.bfloat16), w1_ref[...],
                    preferred_element_type=jnp.float32) + b1_ref[...]
        h = jax.nn.gelu(h, approximate=True)          # tanh GELU -> EUP slot
        # TODO(synk): nn.Dropout is identity here (inference semantics), no RNG masking.
        return jnp.dot(h.astype(jnp.bfloat16), w2p_ref[...],
                       preferred_element_type=jnp.float32)

    o = (head(g5_ref, be5_ref, w15_ref, b15_ref, w2p5_ref)
         + head(gd_ref, bed_ref, w1d_ref, b1d_ref, w2pd_ref)
         + b2p_ref[...])
    o_ref[...] = o                                    # single lane-dense (B_pad, 128) store


def _const_spec(shape):
    zeros = (0,) * len(shape)
    return pl.BlockSpec(shape, lambda i, ids, zeros=zeros: zeros)


def fused_personality_heads(cls_ids, embed_table, packed):
    """One fused pallas_call: CLS gather + both personality heads."""
    B = cls_ids.shape[0]
    B_pad = ((B + 7) // 8) * 8                        # pad batch to 8-sublane multiple
    ids_pad = jnp.zeros((B_pad,), jnp.int32).at[:B].set(cls_ids.astype(jnp.int32))

    H = embed_table.shape[1]
    I = packed["w1_b5"].shape[1]

    param_order = ["g_b5", "be_b5", "w1_b5", "b1_b5", "w2p_b5",
                   "g_dt", "be_dt", "w1_dt", "b1_dt", "w2p_dt", "b2p"]
    params = [packed[k] for k in param_order]

    in_specs = [pl.BlockSpec(memory_space=pl.ANY)]    # embed table stays in HBM
    in_specs += [_const_spec(tuple(p.shape)) for p in params]

    flops = 2 * 2 * B_pad * (H * I + I * OUT_PAD)     # both heads, both matmuls
    bytes_accessed = (B_pad * H * 4                                  # gathered CLS rows
                      + 2 * (H * I + I * OUT_PAD) * 2                # bf16 weights
                      + (4 * H + 2 * I + OUT_PAD) * 4                # LN params + biases
                      + B_pad * OUT_PAD * 4)                         # output slab
    cost = pl.CostEstimate(flops=flops,
                           transcendentals=2 * B_pad * I,
                           bytes_accessed=bytes_accessed)

    out = pl.pallas_call(
        _fused_heads_kernel,
        out_shape=jax.ShapeDtypeStruct((B_pad, OUT_PAD), jnp.float32),
        grid_spec=pltpu.PrefetchScalarGridSpec(
            num_scalar_prefetch=1,
            grid=(1,),
            in_specs=in_specs,
            out_specs=pl.BlockSpec((B_pad, OUT_PAD), lambda i, ids: (0, 0)),
            scratch_shapes=[
                pltpu.VMEM((B_pad, H), jnp.float32),
                pltpu.SemaphoreType.DMA((B_pad,)),
            ],
        ),
        compiler_params=pltpu.CompilerParams(dimension_semantics=("arbitrary",)),
        cost_estimate=cost,
    )(ids_pad, embed_table, *params)

    big_five = out[:B, :N_BIG_FIVE]
    dark_triad = out[:B, N_BIG_FIVE:N_BIG_FIVE + N_DARK_TRIAD]
    return big_five, dark_triad


def init_head_params(key, hidden, intermediate, n_out):
    """Kaiming-normal (fan_in, relu) Linear weights, zero bias; LN gamma=1, beta=0."""
    k1, k2 = jax.random.split(key)
    std1 = math.sqrt(2.0 / hidden)
    std2 = math.sqrt(2.0 / intermediate)
    return dict(
        gamma=jnp.ones((1, hidden), jnp.float32),
        beta=jnp.zeros((1, hidden), jnp.float32),
        w1=jax.random.normal(k1, (hidden, intermediate), jnp.float32) * std1,
        b1=jnp.zeros((1, intermediate), jnp.float32),
        w2=jax.random.normal(k2, (intermediate, n_out), jnp.float32) * std2,
        b2=jnp.zeros((1, n_out), jnp.float32),
    )


def pack_head_params(big_five, dark_triad, out_pad=OUT_PAD):
    """One-time packing: bf16 weights, W2/b2 zero-padded into a 128-lane slab."""
    I = big_five["w1"].shape[1]
    w2p_b5 = (jnp.zeros((I, out_pad), jnp.float32)
              .at[:, :N_BIG_FIVE].set(big_five["w2"])).astype(jnp.bfloat16)
    w2p_dt = (jnp.zeros((I, out_pad), jnp.float32)
              .at[:, N_BIG_FIVE:N_BIG_FIVE + N_DARK_TRIAD].set(dark_triad["w2"])
              ).astype(jnp.bfloat16)
    b2p = (jnp.zeros((1, out_pad), jnp.float32)
           .at[:, :N_BIG_FIVE].set(big_five["b2"])
           .at[:, N_BIG_FIVE:N_BIG_FIVE + N_DARK_TRIAD].set(dark_triad["b2"]))
    return dict(
        g_b5=big_five["gamma"], be_b5=big_five["beta"],
        w1_b5=big_five["w1"].astype(jnp.bfloat16), b1_b5=big_five["b1"],
        w2p_b5=w2p_b5,
        g_dt=dark_triad["gamma"], be_dt=dark_triad["beta"],
        w1_dt=dark_triad["w1"].astype(jnp.bfloat16), b1_dt=dark_triad["b1"],
        w2p_dt=w2p_dt,
        b2p=b2p,
    )


@jax.jit
def core_personality_forward(input_ids, attention_mask, embed_table, packed_params):
    # TODO(synk): the pretrained BERT encoder has no in-script Pallas equivalent;
    # the pooled CLS vector is a deterministic embedding-lookup stand-in gathered
    # directly inside the fused head kernel.
    del attention_mask  # consumed only by the (untranslated) BERT encoder
    cls_ids = input_ids[:, 0].astype(jnp.int32)
    big_five, dark_triad = fused_personality_heads(cls_ids, embed_table, packed_params)
    return {"big_five": big_five, "dark_triad": dark_triad}


def _reference(pooled, b5, dt):
    """Pure-JAX f32 reference of the two heads (for a loose sanity check)."""
    mu = pooled.mean(-1, keepdims=True)
    var = ((pooled - mu) ** 2).mean(-1, keepdims=True)
    xn = (pooled - mu) / jnp.sqrt(var + LN_EPS)

    def head(p):
        h = (xn * p["gamma"] + p["beta"]) @ p["w1"] + p["b1"]
        h = jax.nn.gelu(h, approximate=True)
        return h @ p["w2"] + p["b2"]

    return head(b5), head(dt)


if __name__ == "__main__":
    # Small shapes consistent with the module's forward
    B, S = 2, 8          # batch, sequence length
    VOCAB = 64
    HIDDEN = 128         # stands in for config hidden_size (768)
    INTER = 64           # stands in for config intermediate_size (256)

    key = jax.random.PRNGKey(0)
    k_ids, k_emb, k_b5, k_dt = jax.random.split(key, 4)

    input_ids = jax.random.randint(k_ids, (B, S), 0, VOCAB, dtype=jnp.int32)
    attention_mask = jnp.ones((B, S), dtype=jnp.int32)
    embed_table = jax.random.normal(k_emb, (VOCAB, HIDDEN), jnp.float32) * 0.02

    b5 = init_head_params(k_b5, HIDDEN, INTER, N_BIG_FIVE)
    dt = init_head_params(k_dt, HIDDEN, INTER, N_DARK_TRIAD)
    packed = pack_head_params(b5, dt)

    out = core_personality_forward(input_ids, attention_mask, embed_table, packed)
    jax.block_until_ready(out)

    assert out["big_five"].shape == (B, N_BIG_FIVE)
    assert out["dark_triad"].shape == (B, N_DARK_TRIAD)
    assert out["big_five"].dtype == jnp.float32
    assert out["dark_triad"].dtype == jnp.float32

    # Loose numerical sanity check vs pure-JAX f32 reference (bf16 matmul tolerance).
    pooled_ref = embed_table[input_ids[:, 0], :]
    ref_b5, ref_dt = _reference(pooled_ref, b5, dt)
    assert float(jnp.max(jnp.abs(out["big_five"] - ref_b5))) < 5e-2
    assert float(jnp.max(jnp.abs(out["dark_triad"] - ref_dt))) < 5e-2

    print("KERNEL_OK")
</pallas_src>

<mosaic_0001>
module attributes {stable_mosaic.version = 11 : i64} {
  func.func @_fused_heads_kernel(%arg0: i32, %arg1: memref<8xi32, #tpu.memory_space<smem>>, %arg2: memref<64x128xf32, #tpu.memory_space<any>>, %arg3: memref<1x128xf32, #tpu.memory_space<vmem>>, %arg4: memref<1x128xf32, #tpu.memory_space<vmem>>, %arg5: memref<128x64xbf16, #tpu.memory_space<vmem>>, %arg6: memref<1x64xf32, #tpu.memory_space<vmem>>, %arg7: memref<64x128xbf16, #tpu.memory_space<vmem>>, %arg8: memref<1x128xf32, #tpu.memory_space<vmem>>, %arg9: memref<1x128xf32, #tpu.memory_space<vmem>>, %arg10: memref<128x64xbf16, #tpu.memory_space<vmem>>, %arg11: memref<1x64xf32, #tpu.memory_space<vmem>>, %arg12: memref<64x128xbf16, #tpu.memory_space<vmem>>, %arg13: memref<1x128xf32, #tpu.memory_space<vmem>>, %arg14: memref<8x128xf32, #tpu.memory_space<vmem>>, %arg15: memref<8x128xf32, #tpu.memory_space<vmem>>, %arg16: memref<8x!tpu.dma_semaphore, #tpu.memory_space<semaphore_mem>>) attributes {dimension_semantics = [#tpu.dimension_semantics<arbitrary>], iteration_bounds = array<i64: 1>, scalar_prefetch = 1 : i64, scratch_operands = 2 : i64, tpu.core_type = #tpu.core_type<tc>, window_params = [{}, {pipeline_mode = #tpu.pipeline_mode<synchronous>, transform_indices = @transform_1, window_bounds = array<i64: 1, 128>}, {pipeline_mode = #tpu.pipeline_mode<synchronous>, transform_indices = @transform_2, window_bounds = array<i64: 1, 128>}, {pipeline_mode = #tpu.pipeline_mode<synchronous>, transform_indices = @transform_3, window_bounds = array<i64: 128, 64>}, {pipeline_mode = #tpu.pipeline_mode<synchronous>, transform_indices = @transform_4, window_bounds = array<i64: 1, 64>}, {pipeline_mode = #tpu.pipeline_mode<synchronous>, transform_indices = @transform_5, window_bounds = array<i64: 64, 128>}, {pipeline_mode = #tpu.pipeline_mode<synchronous>, transform_indices = @transform_6, window_bounds = array<i64: 1, 128>}, {pipeline_mode = #tpu.pipeline_mode<synchronous>, transform_indices = @transform_7, window_bounds = array<i64: 1, 128>}, {pipeline_mode = #tpu.pipeline_mode<synchronous>, transform_indices = @transform_8, window_bounds = array<i64: 128, 64>}, {pipeline_mode = #tpu.pipeline_mode<synchronous>, transform_indices = @transform_9, window_bounds = array<i64: 1, 64>}, {pipeline_mode = #tpu.pipeline_mode<synchronous>, transform_indices = @transform_10, window_bounds = array<i64: 64, 128>}, {pipeline_mode = #tpu.pipeline_mode<synchronous>, transform_indices = @transform_11, window_bounds = array<i64: 1, 128>}, {pipeline_mode = #tpu.pipeline_mode<synchronous>, transform_indices = @transform_12, window_bounds = array<i64: 8, 128>}]} {
    %c0 = arith.constant 0 : index
    %0 = memref.load %arg1[%c0] : memref<8xi32, #tpu.memory_space<smem>>
    %c0_i32 = arith.constant 0 : i32
    %c0_i32_0 = arith.constant 0 : i32
    %1 = tpu.memref_slice %arg2[%0, %c0_i32_0] : memref<64x128xf32, #tpu.memory_space<any>> -> memref<1x128xf32, #tpu.memory_space<any>>
    %c0_i32_1 = arith.constant 0 : i32
    %c0_i32_2 = arith.constant 0 : i32
    %2 = tpu.memref_slice %arg15[%c0_i32_1, %c0_i32_2] : memref<8x128xf32, #tpu.memory_space<vmem>> -> memref<1x128xf32, #tpu.memory_space<vmem>>
    %3 = tpu.memref_slice %arg16[%c0_i32] : memref<8x!tpu.dma_semaphore, #tpu.memory_space<semaphore_mem>> -> memref<1x!tpu.dma_semaphore, #tpu.memory_space<semaphore_mem>>
    %4 = tpu.memref_squeeze %3 : memref<1x!tpu.dma_semaphore, #tpu.memory_space<semaphore_mem>> -> memref<!tpu.dma_semaphore, #tpu.memory_space<semaphore_mem>>
    tpu.enqueue_dma source(%1 : memref<1x128xf32, #tpu.memory_space<any>>) target(%2 : memref<1x128xf32, #tpu.memory_space<vmem>>) target_semaphore(%4 : memref<!tpu.dma_semaphore, #tpu.memory_space<semaphore_mem>>)
    %c1 = arith.constant 1 : index
    %5 = memref.load %arg1[%c1] : memref<8xi32, #tpu.memory_space<smem>>
    %c1_i32 = arith.constant 1 : i32
    %c0_i32_3 = arith.constant 0 : i32
    %6 = tpu.memref_slice %arg2[%5, %c0_i32_3] : memref<64x128xf32, #tpu.memory_space<any>> -> memref<1x128xf32, #tpu.memory_space<any>>
    %c1_i32_4 = arith.constant 1 : i32
    %c0_i32_5 = arith.constant 0 : i32
    %7 = tpu.memref_slice %arg15[%c1_i32_4, %c0_i32_5] : memref<8x128xf32, #tpu.memory_space<vmem>> -> memref<1x128xf32, #tpu.memory_space<vmem>>
    %8 = tpu.memref_slice %arg16[%c1_i32] : memref<8x!tpu.dma_semaphore, #tpu.memory_space<semaphore_mem>> -> memref<1x!tpu.dma_semaphore, #tpu.memory_space<semaphore_mem>>
    %9 = tpu.memref_squeeze %8 : memref<1x!tpu.dma_semaphore, #tpu.memory_space<semaphore_mem>> -> memref<!tpu.dma_semaphore, #tpu.memory_space<semaphore_mem>>
    tpu.enqueue_dma source(%6 : memref<1x128xf32, #tpu.memory_space<any>>) target(%7 : memref<1x128xf32, #tpu.memory_space<vmem>>) target_semaphore(%9 : memref<!tpu.dma_semaphore, #tpu.memory_space<semaphore_mem>>)
    %c2 = arith.constant 2 : index
    %10 = memref.load %arg1[%c2] : memref<8xi32, #tpu.memory_space<smem>>
    %c2_i32 = arith.constant 2 : i32
    %c0_i32_6 = arith.constant 0 : i32
    %11 = tpu.memref_slice %arg2[%10, %c0_i32_6] : memref<64x128xf32, #tpu.memory_space<any>> -> memref<1x128xf32, #tpu.memory_space<any>>
    %c2_i32_7 = arith.constant 2 : i32
    %c0_i32_8 = arith.constant 0 : i32
    %12 = tpu.memref_slice %arg15[%c2_i32_7, %c0_i32_8] : memref<8x128xf32, #tpu.memory_space<vmem>> -> memref<1x128xf32, #tpu.memory_space<vmem>>
    %13 = tpu.memref_slice %arg16[%c2_i32] : memref<8x!tpu.dma_semaphore, #tpu.memory_space<semaphore_mem>> -> memref<1x!tpu.dma_semaphore, #tpu.memory_space<semaphore_mem>>
    %14 = tpu.memref_squeeze %13 : memref<1x!tpu.dma_semaphore, #tpu.memory_space<semaphore_mem>> -> memref<!tpu.dma_semaphore, #tpu.memory_space<semaphore_mem>>
    tpu.enqueue_dma source(%11 : memref<1x128xf32, #tpu.memory_space<any>>) target(%12 : memref<1x128xf32, #tpu.memory_space<vmem>>) target_semaphore(%14 : memref<!tpu.dma_semaphore, #tpu.memory_space<semaphore_mem>>)
    %c3 = arith.constant 3 : index
    %15 = memref.load %arg1[%c3] : memref<8xi32, #tpu.memory_space<smem>>
    %c3_i32 = arith.constant 3 : i32
    %c0_i32_9 = arith.constant 0 : i32
    %16 = tpu.memref_slice %arg2[%15, %c0_i32_9] : memref<64x128xf32, #tpu.memory_space<any>> -> memref<1x128xf32, #tpu.memory_space<any>>
    %c3_i32_10 = arith.constant 3 : i32
    %c0_i32_11 = arith.constant 0 : i32
    %17 = tpu.memref_slice %arg15[%c3_i32_10, %c0_i32_11] : memref<8x128xf32, #tpu.memory_space<vmem>> -> memref<1x128xf32, #tpu.memory_space<vmem>>
    %18 = tpu.memref_slice %arg16[%c3_i32] : memref<8x!tpu.dma_semaphore, #tpu.memory_space<semaphore_mem>> -> memref<1x!tpu.dma_semaphore, #tpu.memory_space<semaphore_mem>>
    %19 = tpu.memref_squeeze %18 : memref<1x!tpu.dma_semaphore, #tpu.memory_space<semaphore_mem>> -> memref<!tpu.dma_semaphore, #tpu.memory_space<semaphore_mem>>
    tpu.enqueue_dma source(%16 : memref<1x128xf32, #tpu.memory_space<any>>) target(%17 : memref<1x128xf32, #tpu.memory_space<vmem>>) target_semaphore(%19 : memref<!tpu.dma_semaphore, #tpu.memory_space<semaphore_mem>>)
    %c4 = arith.constant 4 : index
    %20 = memref.load %arg1[%c4] : memref<8xi32, #tpu.memory_space<smem>>
    %c4_i32 = arith.constant 4 : i32
    %c0_i32_12 = arith.constant 0 : i32
    %21 = tpu.memref_slice %arg2[%20, %c0_i32_12] : memref<64x128xf32, #tpu.memory_space<any>> -> memref<1x128xf32, #tpu.memory_space<any>>
    %c4_i32_13 = arith.constant 4 : i32
    %c0_i32_14 = arith.constant 0 : i32
    %22 = tpu.memref_slice %arg15[%c4_i32_13, %c0_i32_14] : memref<8x128xf32, #tpu.memory_space<vmem>> -> memref<1x128xf32, #tpu.memory_space<vmem>>
    %23 = tpu.memref_slice %arg16[%c4_i32] : memref<8x!tpu.dma_semaphore, #tpu.memory_space<semaphore_mem>> -> memref<1x!tpu.dma_semaphore, #tpu.memory_space<semaphore_mem>>
    %24 = tpu.memref_squeeze %23 : memref<1x!tpu.dma_semaphore, #tpu.memory_space<semaphore_mem>> -> memref<!tpu.dma_semaphore, #tpu.memory_space<semaphore_mem>>
    tpu.enqueue_dma source(%21 : memref<1x128xf32, #tpu.memory_space<any>>) target(%22 : memref<1x128xf32, #tpu.memory_space<vmem>>) target_semaphore(%24 : memref<!tpu.dma_semaphore, #tpu.memory_space<semaphore_mem>>)
    %c5 = arith.constant 5 : index
    %25 = memref.load %arg1[%c5] : memref<8xi32, #tpu.memory_space<smem>>
    %c5_i32 = arith.constant 5 : i32
    %c0_i32_15 = arith.constant 0 : i32
    %26 = tpu.memref_slice %arg2[%25, %c0_i32_15] : memref<64x128xf32, #tpu.memory_space<any>> -> memref<1x128xf32, #tpu.memory_space<any>>
    %c5_i32_16 = arith.constant 5 : i32
    %c0_i32_17 = arith.constant 0 : i32
    %27 = tpu.memref_slice %arg15[%c5_i32_16, %c0_i32_17] : memref<8x128xf32, #tpu.memory_space<vmem>> -> memref<1x128xf32, #tpu.memory_space<vmem>>
    %28 = tpu.memref_slice %arg16[%c5_i32] : memref<8x!tpu.dma_semaphore, #tpu.memory_space<semaphore_mem>> -> memref<1x!tpu.dma_semaphore, #tpu.memory_space<semaphore_mem>>
    %29 = tpu.memref_squeeze %28 : memref<1x!tpu.dma_semaphore, #tpu.memory_space<semaphore_mem>> -> memref<!tpu.dma_semaphore, #tpu.memory_space<semaphore_mem>>
    tpu.enqueue_dma source(%26 : memref<1x128xf32, #tpu.memory_space<any>>) target(%27 : memref<1x128xf32, #tpu.memory_space<vmem>>) target_semaphore(%29 : memref<!tpu.dma_semaphore, #tpu.memory_space<semaphore_mem>>)
    %c6 = arith.constant 6 : index
    %30 = memref.load %arg1[%c6] : memref<8xi32, #tpu.memory_space<smem>>
    %c6_i32 = arith.constant 6 : i32
    %c0_i32_18 = arith.constant 0 : i32
    %31 = tpu.memref_slice %arg2[%30, %c0_i32_18] : memref<64x128xf32, #tpu.memory_space<any>> -> memref<1x128xf32, #tpu.memory_space<any>>
    %c6_i32_19 = arith.constant 6 : i32
    %c0_i32_20 = arith.constant 0 : i32
    %32 = tpu.memref_slice %arg15[%c6_i32_19, %c0_i32_20] : memref<8x128xf32, #tpu.memory_space<vmem>> -> memref<1x128xf32, #tpu.memory_space<vmem>>
    %33 = tpu.memref_slice %arg16[%c6_i32] : memref<8x!tpu.dma_semaphore, #tpu.memory_space<semaphore_mem>> -> memref<1x!tpu.dma_semaphore, #tpu.memory_space<semaphore_mem>>
    %34 = tpu.memref_squeeze %33 : memref<1x!tpu.dma_semaphore, #tpu.memory_space<semaphore_mem>> -> memref<!tpu.dma_semaphore, #tpu.memory_space<semaphore_mem>>
    tpu.enqueue_dma source(%31 : memref<1x128xf32, #tpu.memory_space<any>>) target(%32 : memref<1x128xf32, #tpu.memory_space<vmem>>) target_semaphore(%34 : memref<!tpu.dma_semaphore, #tpu.memory_space<semaphore_mem>>)
    %c7 = arith.constant 7 : index
    %35 = memref.load %arg1[%c7] : memref<8xi32, #tpu.memory_space<smem>>
    %c7_i32 = arith.constant 7 : i32
    %c0_i32_21 = arith.constant 0 : i32
    %36 = tpu.memref_slice %arg2[%35, %c0_i32_21] : memref<64x128xf32, #tpu.memory_space<any>> -> memref<1x128xf32, #tpu.memory_space<any>>
    %c7_i32_22 = arith.constant 7 : i32
    %c0_i32_23 = arith.constant 0 : i32
    %37 = tpu.memref_slice %arg15[%c7_i32_22, %c0_i32_23] : memref<8x128xf32, #tpu.memory_space<vmem>> -> memref<1x128xf32, #tpu.memory_space<vmem>>
    %38 = tpu.memref_slice %arg16[%c7_i32] : memref<8x!tpu.dma_semaphore, #tpu.memory_space<semaphore_mem>> -> memref<1x!tpu.dma_semaphore, #tpu.memory_space<semaphore_mem>>
    %39 = tpu.memref_squeeze %38 : memref<1x!tpu.dma_semaphore, #tpu.memory_space<semaphore_mem>> -> memref<!tpu.dma_semaphore, #tpu.memory_space<semaphore_mem>>
    tpu.enqueue_dma source(%36 : memref<1x128xf32, #tpu.memory_space<any>>) target(%37 : memref<1x128xf32, #tpu.memory_space<vmem>>) target_semaphore(%39 : memref<!tpu.dma_semaphore, #tpu.memory_space<semaphore_mem>>)
    %c0_i32_24 = arith.constant 0 : i32
    %c0_i32_25 = arith.constant 0 : i32
    %40 = tpu.memref_slice %arg2[%0, %c0_i32_25] : memref<64x128xf32, #tpu.memory_space<any>> -> memref<1x128xf32, #tpu.memory_space<any>>
    %c0_i32_26 = arith.constant 0 : i32
    %c0_i32_27 = arith.constant 0 : i32
    %41 = tpu.memref_slice %arg15[%c0_i32_26, %c0_i32_27] : memref<8x128xf32, #tpu.memory_space<vmem>> -> memref<1x128xf32, #tpu.memory_space<vmem>>
    %42 = tpu.memref_slice %arg16[%c0_i32_24] : memref<8x!tpu.dma_semaphore, #tpu.memory_space<semaphore_mem>> -> memref<1x!tpu.dma_semaphore, #tpu.memory_space<semaphore_mem>>
    %43 = tpu.memref_squeeze %42 : memref<1x!tpu.dma_semaphore, #tpu.memory_space<semaphore_mem>> -> memref<!tpu.dma_semaphore, #tpu.memory_space<semaphore_mem>>
    tpu.wait_dma2 semaphore(%43 : memref<!tpu.dma_semaphore, #tpu.memory_space<semaphore_mem>>) src(%40 : memref<1x128xf32, #tpu.memory_space<any>>) dst(%41 : memref<1x128xf32, #tpu.memory_space<vmem>>)
    %c1_i32_28 = arith.constant 1 : i32
    %c0_i32_29 = arith.constant 0 : i32
    %44 = tpu.memref_slice %arg2[%5, %c0_i32_29] : memref<64x128xf32, #tpu.memory_space<any>> -> memref<1x128xf32, #tpu.memory_space<any>>
    %c1_i32_30 = arith.constant 1 : i32
    %c0_i32_31 = arith.constant 0 : i32
    %45 = tpu.memref_slice %arg15[%c1_i32_30, %c0_i32_31] : memref<8x128xf32, #tpu.memory_space<vmem>> -> memref<1x128xf32, #tpu.memory_space<vmem>>
    %46 = tpu.memref_slice %arg16[%c1_i32_28] : memref<8x!tpu.dma_semaphore, #tpu.memory_space<semaphore_mem>> -> memref<1x!tpu.dma_semaphore, #tpu.memory_space<semaphore_mem>>
    %47 = tpu.memref_squeeze %46 : memref<1x!tpu.dma_semaphore, #tpu.memory_space<semaphore_mem>> -> memref<!tpu.dma_semaphore, #tpu.memory_space<semaphore_mem>>
    tpu.wait_dma2 semaphore(%47 : memref<!tpu.dma_semaphore, #tpu.memory_space<semaphore_mem>>) src(%44 : memref<1x128xf32, #tpu.memory_space<any>>) dst(%45 : memref<1x128xf32, #tpu.memory_space<vmem>>)
    %c2_i32_32 = arith.constant 2 : i32
    %c0_i32_33 = arith.constant 0 : i32
    %48 = tpu.memref_slice %arg2[%10, %c0_i32_33] : memref<64x128xf32, #tpu.memory_space<any>> -> memref<1x128xf32, #tpu.memory_space<any>>
    %c2_i32_34 = arith.constant 2 : i32
    %c0_i32_35 = arith.constant 0 : i32
    %49 = tpu.memref_slice %arg15[%c2_i32_34, %c0_i32_35] : memref<8x128xf32, #tpu.memory_space<vmem>> -> memref<1x128xf32, #tpu.memory_space<vmem>>
    %50 = tpu.memref_slice %arg16[%c2_i32_32] : memref<8x!tpu.dma_semaphore, #tpu.memory_space<semaphore_mem>> -> memref<1x!tpu.dma_semaphore, #tpu.memory_space<semaphore_mem>>
    %51 = tpu.memref_squeeze %50 : memref<1x!tpu.dma_semaphore, #tpu.memory_space<semaphore_mem>> -> memref<!tpu.dma_semaphore, #tpu.memory_space<semaphore_mem>>
    tpu.wait_dma2 semaphore(%51 : memref<!tpu.dma_semaphore, #tpu.memory_space<semaphore_mem>>) src(%48 : memref<1x128xf32, #tpu.memory_space<any>>) dst(%49 : memref<1x128xf32, #tpu.memory_space<vmem>>)
    %c3_i32_36 = arith.constant 3 : i32
    %c0_i32_37 = arith.constant 0 : i32
    %52 = tpu.memref_slice %arg2[%15, %c0_i32_37] : memref<64x128xf32, #tpu.memory_space<any>> -> memref<1x128xf32, #tpu.memory_space<any>>
    %c3_i32_38 = arith.constant 3 : i32
    %c0_i32_39 = arith.constant 0 : i32
    %53 = tpu.memref_slice %arg15[%c3_i32_38, %c0_i32_39] : memref<8x128xf32, #tpu.memory_space<vmem>> -> memref<1x128xf32, #tpu.memory_space<vmem>>
    %54 = tpu.memref_slice %arg16[%c3_i32_36] : memref<8x!tpu.dma_semaphore, #tpu.memory_space<semaphore_mem>> -> memref<1x!tpu.dma_semaphore, #tpu.memory_space<semaphore_mem>>
    %55 = tpu.memref_squeeze %54 : memref<1x!tpu.dma_semaphore, #tpu.memory_space<semaphore_mem>> -> memref<!tpu.dma_semaphore, #tpu.memory_space<semaphore_mem>>
    tpu.wait_dma2 semaphore(%55 : memref<!tpu.dma_semaphore, #tpu.memory_space<semaphore_mem>>) src(%52 : memref<1x128xf32, #tpu.memory_space<any>>) dst(%53 : memref<1x128xf32, #tpu.memory_space<vmem>>)
    %c4_i32_40 = arith.constant 4 : i32
    %c0_i32_41 = arith.constant 0 : i32
    %56 = tpu.memref_slice %arg2[%20, %c0_i32_41] : memref<64x128xf32, #tpu.memory_space<any>> -> memref<1x128xf32, #tpu.memory_space<any>>
    %c4_i32_42 = arith.constant 4 : i32
    %c0_i32_43 = arith.constant 0 : i32
    %57 = tpu.memref_slice %arg15[%c4_i32_42, %c0_i32_43] : memref<8x128xf32, #tpu.memory_space<vmem>> -> memref<1x128xf32, #tpu.memory_space<vmem>>
    %58 = tpu.memref_slice %arg16[%c4_i32_40] : memref<8x!tpu.dma_semaphore, #tpu.memory_space<semaphore_mem>> -> memref<1x!tpu.dma_semaphore, #tpu.memory_space<semaphore_mem>>
    %59 = tpu.memref_squeeze %58 : memref<1x!tpu.dma_semaphore, #tpu.memory_space<semaphore_mem>> -> memref<!tpu.dma_semaphore, #tpu.memory_space<semaphore_mem>>
    tpu.wait_dma2 semaphore(%59 : memref<!tpu.dma_semaphore, #tpu.memory_space<semaphore_mem>>) src(%56 : memref<1x128xf32, #tpu.memory_space<any>>) dst(%57 : memref<1x128xf32, #tpu.memory_space<vmem>>)
    %c5_i32_44 = arith.constant 5 : i32
    %c0_i32_45 = arith.constant 0 : i32
    %60 = tpu.memref_slice %arg2[%25, %c0_i32_45] : memref<64x128xf32, #tpu.memory_space<any>> -> memref<1x128xf32, #tpu.memory_space<any>>
    %c5_i32_46 = arith.constant 5 : i32
    %c0_i32_47 = arith.constant 0 : i32
    %61 = tpu.memref_slice %arg15[%c5_i32_46, %c0_i32_47] : memref<8x128xf32, #tpu.memory_space<vmem>> -> memref<1x128xf32, #tpu.memory_space<vmem>>
    %62 = tpu.memref_slice %arg16[%c5_i32_44] : memref<8x!tpu.dma_semaphore, #tpu.memory_space<semaphore_mem>> -> memref<1x!tpu.dma_semaphore, #tpu.memory_space<semaphore_mem>>
    %63 = tpu.memref_squeeze %62 : memref<1x!tpu.dma_semaphore, #tpu.memory_space<semaphore_mem>> -> memref<!tpu.dma_semaphore, #tpu.memory_space<semaphore_mem>>
    tpu.wait_dma2 semaphore(%63 : memref<!tpu.dma_semaphore, #tpu.memory_space<semaphore_mem>>) src(%60 : memref<1x128xf32, #tpu.memory_space<any>>) dst(%61 : memref<1x128xf32, #tpu.memory_space<vmem>>)
    %c6_i32_48 = arith.constant 6 : i32
    %c0_i32_49 = arith.constant 0 : i32
    %64 = tpu.memref_slice %arg2[%30, %c0_i32_49] : memref<64x128xf32, #tpu.memory_space<any>> -> memref<1x128xf32, #tpu.memory_space<any>>
    %c6_i32_50 = arith.constant 6 : i32
    %c0_i32_51 = arith.constant 0 : i32
    %65 = tpu.memref_slice %arg15[%c6_i32_50, %c0_i32_51] : memref<8x128xf32, #tpu.memory_space<vmem>> -> memref<1x128xf32, #tpu.memory_space<vmem>>
    %66 = tpu.memref_slice %arg16[%c6_i32_48] : memref<8x!tpu.dma_semaphore, #tpu.memory_space<semaphore_mem>> -> memref<1x!tpu.dma_semaphore, #tpu.memory_space<semaphore_mem>>
    %67 = tpu.memref_squeeze %66 : memref<1x!tpu.dma_semaphore, #tpu.memory_space<semaphore_mem>> -> memref<!tpu.dma_semaphore, #tpu.memory_space<semaphore_mem>>
    tpu.wait_dma2 semaphore(%67 : memref<!tpu.dma_semaphore, #tpu.memory_space<semaphore_mem>>) src(%64 : memref<1x128xf32, #tpu.memory_space<any>>) dst(%65 : memref<1x128xf32, #tpu.memory_space<vmem>>)
    %c7_i32_52 = arith.constant 7 : i32
    %c0_i32_53 = arith.constant 0 : i32
    %68 = tpu.memref_slice %arg2[%35, %c0_i32_53] : memref<64x128xf32, #tpu.memory_space<any>> -> memref<1x128xf32, #tpu.memory_space<any>>
    %c7_i32_54 = arith.constant 7 : i32
    %c0_i32_55 = arith.constant 0 : i32
    %69 = tpu.memref_slice %arg15[%c7_i32_54, %c0_i32_55] : memref<8x128xf32, #tpu.memory_space<vmem>> -> memref<1x128xf32, #tpu.memory_space<vmem>>
    %70 = tpu.memref_slice %arg16[%c7_i32_52] : memref<8x!tpu.dma_semaphore, #tpu.memory_space<semaphore_mem>> -> memref<1x!tpu.dma_semaphore, #tpu.memory_space<semaphore_mem>>
    %71 = tpu.memref_squeeze %70 : memref<1x!tpu.dma_semaphore, #tpu.memory_space<semaphore_mem>> -> memref<!tpu.dma_semaphore, #tpu.memory_space<semaphore_mem>>
    tpu.wait_dma2 semaphore(%71 : memref<!tpu.dma_semaphore, #tpu.memory_space<semaphore_mem>>) src(%68 : memref<1x128xf32, #tpu.memory_space<any>>) dst(%69 : memref<1x128xf32, #tpu.memory_space<vmem>>)
    %c0_56 = arith.constant 0 : index
    %c0_57 = arith.constant 0 : index
    %72 = vector.load %arg15[%c0_56, %c0_57] : memref<8x128xf32, #tpu.memory_space<vmem>>, vector<8x128xf32>
    %cst = arith.constant dense<0.000000e+00> : vector<8xf32>
    %73 = vector.multi_reduction <add>, %72, %cst [1] : vector<8x128xf32> to vector<8xf32>
    %74 = vector.shape_cast %73 : vector<8xf32> to vector<8x1xf32>
    %cst_58 = arith.constant 1.280000e+02 : f32
    %75 = vector.broadcast %cst_58 : f32 to vector<8x1xf32>
    %76 = arith.divf %74, %75 : vector<8x1xf32>
    %77 = vector.broadcast %76 : vector<8x1xf32> to vector<8x128xf32>
    %78 = arith.subf %72, %77 : vector<8x128xf32>
    %79 = arith.mulf %78, %78 : vector<8x128xf32>
    %cst_59 = arith.constant dense<0.000000e+00> : vector<8xf32>
    %80 = vector.multi_reduction <add>, %79, %cst_59 [1] : vector<8x128xf32> to vector<8xf32>
    %81 = vector.shape_cast %80 : vector<8xf32> to vector<8x1xf32>
    %cst_60 = arith.constant 1.280000e+02 : f32
    %82 = vector.broadcast %cst_60 : f32 to vector<8x1xf32>
    %83 = arith.divf %81, %82 : vector<8x1xf32>
    %84 = vector.broadcast %76 : vector<8x1xf32> to vector<8x128xf32>
    %85 = arith.subf %72, %84 : vector<8x128xf32>
    %cst_61 = arith.constant 9.99999974E-6 : f32
    %86 = vector.broadcast %cst_61 : f32 to vector<8x1xf32>
    %87 = arith.addf %83, %86 : vector<8x1xf32>
    %88 = math.rsqrt %87 : vector<8x1xf32>
    %89 = vector.broadcast %88 : vector<8x1xf32> to vector<8x128xf32>
    %90 = arith.mulf %85, %89 : vector<8x128xf32>
    %c0_62 = arith.constant 0 : index
    %c0_63 = arith.constant 0 : index
    %91 = vector.load %arg3[%c0_62, %c0_63] : memref<1x128xf32, #tpu.memory_space<vmem>>, vector<1x128xf32>
    %92 = vector.broadcast %91 : vector<1x128xf32> to vector<8x128xf32>
    %93 = arith.mulf %90, %92 : vector<8x128xf32>
    %c0_64 = arith.constant 0 : index
    %c0_65 = arith.constant 0 : index
    %94 = vector.load %arg4[%c0_64, %c0_65] : memref<1x128xf32, #tpu.memory_space<vmem>>, vector<1x128xf32>
    %95 = vector.broadcast %94 : vector<1x128xf32> to vector<8x128xf32>
    %96 = arith.addf %93, %95 : vector<8x128xf32>
    %97 = arith.truncf %96 : vector<8x128xf32> to vector<8x128xbf16>
    %c0_66 = arith.constant 0 : index
    %c0_67 = arith.constant 0 : index
    %98 = vector.load %arg5[%c0_66, %c0_67] : memref<128x64xbf16, #tpu.memory_space<vmem>>, vector<128x64xbf16>
    %cst_68 = arith.constant dense<0.000000e+00> : vector<8x64xf32>
    %99 = tpu.matmul %97, %98, %cst_68 {dimension_numbers = #tpu.dot_dimension_numbers<[1], [0], [0], [1], [0, 0, 1, 1], [], []>} : vector<8x128xbf16>, vector<128x64xbf16>, vector<8x64xf32> -> vector<8x64xf32>
    %c0_69 = arith.constant 0 : index
    %c0_70 = arith.constant 0 : index
    %100 = vector.load %arg6[%c0_69, %c0_70] : memref<1x64xf32, #tpu.memory_space<vmem>>, vector<1x64xf32>
    %101 = vector.broadcast %100 : vector<1x64xf32> to vector<8x64xf32>
    %102 = arith.addf %99, %101 : vector<8x64xf32>
    %103 = arith.mulf %102, %102 : vector<8x64xf32>
    %104 = arith.mulf %102, %103 : vector<8x64xf32>
    %cst_71 = arith.constant 4.471500e-02 : f32
    %105 = vector.broadcast %cst_71 : f32 to vector<8x64xf32>
    %106 = arith.mulf %105, %104 : vector<8x64xf32>
    %107 = arith.addf %102, %106 : vector<8x64xf32>
    %cst_72 = arith.constant 0.797884583 : f32
    %108 = vector.broadcast %cst_72 : f32 to vector<8x64xf32>
    %109 = arith.mulf %108, %107 : vector<8x64xf32>
    %110 = math.tanh %109 : vector<8x64xf32>
    %cst_73 = arith.constant 1.000000e+00 : f32
    %111 = vector.broadcast %cst_73 : f32 to vector<8x64xf32>
    %112 = arith.addf %111, %110 : vector<8x64xf32>
    %cst_74 = arith.constant 5.000000e-01 : f32
    %113 = vector.broadcast %cst_74 : f32 to vector<8x64xf32>
    %114 = arith.mulf %113, %112 : vector<8x64xf32>
    %115 = arith.mulf %102, %114 : vector<8x64xf32>
    %116 = arith.truncf %115 : vector<8x64xf32> to vector<8x64xbf16>
    %c0_75 = arith.constant 0 : index
    %c0_76 = arith.constant 0 : index
    %117 = vector.load %arg7[%c0_75, %c0_76] : memref<64x128xbf16, #tpu.memory_space<vmem>>, vector<64x128xbf16>
    %cst_77 = arith.constant dense<0.000000e+00> : vector<8x128xf32>
    %118 = tpu.matmul %116, %117, %cst_77 {dimension_numbers = #tpu.dot_dimension_numbers<[1], [0], [0], [1], [0, 0, 1, 1], [], []>} : vector<8x64xbf16>, vector<64x128xbf16>, vector<8x128xf32> -> vector<8x128xf32>
    %c0_78 = arith.constant 0 : index
    %c0_79 = arith.constant 0 : index
    %119 = vector.load %arg8[%c0_78, %c0_79] : memref<1x128xf32, #tpu.memory_space<vmem>>, vector<1x128xf32>
    %120 = vector.broadcast %119 : vector<1x128xf32> to vector<8x128xf32>
    %121 = arith.mulf %90, %120 : vector<8x128xf32>
    %c0_80 = arith.constant 0 : index
    %c0_81 = arith.constant 0 : index
    %122 = vector.load %arg9[%c0_80, %c0_81] : memref<1x128xf32, #tpu.memory_space<vmem>>, vector<1x128xf32>
    %123 = vector.broadcast %122 : vector<1x128xf32> to vector<8x128xf32>
    %124 = arith.addf %121, %123 : vector<8x128xf32>
    %125 = arith.truncf %124 : vector<8x128xf32> to vector<8x128xbf16>
    %c0_82 = arith.constant 0 : index
    %c0_83 = arith.constant 0 : index
    %126 = vector.load %arg10[%c0_82, %c0_83] : memref<128x64xbf16, #tpu.memory_space<vmem>>, vector<128x64xbf16>
    %cst_84 = arith.constant dense<0.000000e+00> : vector<8x64xf32>
    %127 = tpu.matmul %125, %126, %cst_84 {dimension_numbers = #tpu.dot_dimension_numbers<[1], [0], [0], [1], [0, 0, 1, 1], [], []>} : vector<8x128xbf16>, vector<128x64xbf16>, vector<8x64xf32> -> vector<8x64xf32>
    %c0_85 = arith.constant 0 : index
    %c0_86 = arith.constant 0 : index
    %128 = vector.load %arg11[%c0_85, %c0_86] : memref<1x64xf32, #tpu.memory_space<vmem>>, vector<1x64xf32>
    %129 = vector.broadcast %128 : vector<1x64xf32> to vector<8x64xf32>
    %130 = arith.addf %127, %129 : vector<8x64xf32>
    %131 = arith.mulf %130, %130 : vector<8x64xf32>
    %132 = arith.mulf %130, %131 : vector<8x64xf32>
    %cst_87 = arith.constant 4.471500e-02 : f32
    %133 = vector.broadcast %cst_87 : f32 to vector<8x64xf32>
    %134 = arith.mulf %133, %132 : vector<8x64xf32>
    %135 = arith.addf %130, %134 : vector<8x64xf32>
    %cst_88 = arith.constant 0.797884583 : f32
    %136 = vector.broadcast %cst_88 : f32 to vector<8x64xf32>
    %137 = arith.mulf %136, %135 : vector<8x64xf32>
    %138 = math.tanh %137 : vector<8x64xf32>
    %cst_89 = arith.constant 1.000000e+00 : f32
    %139 = vector.broadcast %cst_89 : f32 to vector<8x64xf32>
    %140 = arith.addf %139, %138 : vector<8x64xf32>
    %cst_90 = arith.constant 5.000000e-01 : f32
    %141 = vector.broadcast %cst_90 : f32 to vector<8x64xf32>
    %142 = arith.mulf %141, %140 : vector<8x64xf32>
    %143 = arith.mulf %130, %142 : vector<8x64xf32>
    %144 = arith.truncf %143 : vector<8x64xf32> to vector<8x64xbf16>
    %c0_91 = arith.constant 0 : index
    %c0_92 = arith.constant 0 : index
    %145 = vector.load %arg12[%c0_91, %c0_92] : memref<64x128xbf16, #tpu.memory_space<vmem>>, vector<64x128xbf16>
    %cst_93 = arith.constant dense<0.000000e+00> : vector<8x128xf32>
    %146 = tpu.matmul %144, %145, %cst_93 {dimension_numbers = #tpu.dot_dimension_numbers<[1], [0], [0], [1], [0, 0, 1, 1], [], []>} : vector<8x64xbf16>, vector<64x128xbf16>, vector<8x128xf32> -> vector<8x128xf32>
    %147 = arith.addf %118, %146 : vector<8x128xf32>
    %c0_94 = arith.constant 0 : index
    %c0_95 = arith.constant 0 : index
    %148 = vector.load %arg13[%c0_94, %c0_95] : memref<1x128xf32, #tpu.memory_space<vmem>>, vector<1x128xf32>
    %149 = vector.broadcast %148 : vector<1x128xf32> to vector<8x128xf32>
    %150 = arith.addf %147, %149 : vector<8x128xf32>
    %c0_96 = arith.constant 0 : index
    %c0_97 = arith.constant 0 : index
    %151 = vector.load %arg14[%c0_96, %c0_97] : memref<8x128xf32, #tpu.memory_space<vmem>>, vector<8x128xf32>
    tpu.vector_store %arg14[%c0_96, %c0_97], %150 {strides = array<i32>} : memref<8x128xf32, #tpu.memory_space<vmem>>, vector<8x128xf32>,
    return
  }
  func.func @transform_1(%arg0: i32, %arg1: memref<8xi32, #tpu.memory_space<smem>>) -> (i32, i32) {
    %c0_i32 = arith.constant 0 : i32
    %c0_i32_0 = arith.constant 0 : i32
    %c0_i32_1 = arith.constant 0 : i32
    return %c0_i32, %c0_i32_0 : i32, i32
  }
  func.func @transform_2(%arg0: i32, %arg1: memref<8xi32, #tpu.memory_space<smem>>) -> (i32, i32) {
    %c0_i32 = arith.constant 0 : i32
    %c0_i32_0 = arith.constant 0 : i32
    %c0_i32_1 = arith.constant 0 : i32
    return %c0_i32, %c0_i32_0 : i32, i32
  }
  func.func @transform_3(%arg0: i32, %arg1: memref<8xi32, #tpu.memory_space<smem>>) -> (i32, i32) {
    %c0_i32 = arith.constant 0 : i32
    %c0_i32_0 = arith.constant 0 : i32
    %c0_i32_1 = arith.constant 0 : i32
    return %c0_i32, %c0_i32_0 : i32, i32
  }
  func.func @transform_4(%arg0: i32, %arg1: memref<8xi32, #tpu.memory_space<smem>>) -> (i32, i32) {
    %c0_i32 = arith.constant 0 : i32
    %c0_i32_0 = arith.constant 0 : i32
    %c0_i32_1 = arith.constant 0 : i32
    return %c0_i32, %c0_i32_0 : i32, i32
  }
  func.func @transform_5(%arg0: i32, %arg1: memref<8xi32, #tpu.memory_space<smem>>) -> (i32, i32) {
    %c0_i32 = arith.constant 0 : i32
    %c0_i32_0 = arith.constant 0 : i32
    %c0_i32_1 = arith.constant 0 : i32
    return %c0_i32, %c0_i32_0 : i32, i32
  }
  func.func @transform_6(%arg0: i32, %arg1: memref<8xi32, #tpu.memory_space<smem>>) -> (i32, i32) {
    %c0_i32 = arith.constant 0 : i32
    %c0_i32_0 = arith.constant 0 : i32
    %c0_i32_1 = arith.constant 0 : i32
    return %c0_i32, %c0_i32_0 : i32, i32
  }
  func.func @transform_7(%arg0: i32, %arg1: memref<8xi32, #tpu.memory_space<smem>>) -> (i32, i32) {
    %c0_i32 = arith.constant 0 : i32
    %c0_i32_0 = arith.constant 0 : i32
    %c0_i32_1 = arith.constant 0 : i32
    return %c0_i32, %c0_i32_0 : i32, i32
  }
  func.func @transform_8(%arg0: i32, %arg1: memref<8xi32, #tpu.memory_space<smem>>) -> (i32, i32) {
    %c0_i32 = arith.constant 0 : i32
    %c0_i32_0 = arith.constant 0 : i32
    %c0_i32_1 = arith.constant 0 : i32
    return %c0_i32, %c0_i32_0 : i32, i32
  }
  func.func @transform_9(%arg0: i32, %arg1: memref<8xi32, #tpu.memory_space<smem>>) -> (i32, i32) {
    %c0_i32 = arith.constant 0 : i32
    %c0_i32_0 = arith.constant 0 : i32
    %c0_i32_1 = arith.constant 0 : i32
    return %c0_i32, %c0_i32_0 : i32, i32
  }
  func.func @transform_10(%arg0: i32, %arg1: memref<8xi32, #tpu.memory_space<smem>>) -> (i32, i32) {
    %c0_i32 = arith.constant 0 : i32
    %c0_i32_0 = arith.constant 0 : i32
    %c0_i32_1 = arith.constant 0 : i32
    return %c0_i32, %c0_i32_0 : i32, i32
  }
  func.func @transform_11(%arg0: i32, %arg1: memref<8xi32, #tpu.memory_space<smem>>) -> (i32, i32) {
    %c0_i32 = arith.constant 0 : i32
    %c0_i32_0 = arith.constant 0 : i32
    %c0_i32_1 = arith.constant 0 : i32
    return %c0_i32, %c0_i32_0 : i32, i32
  }
  func.func @transform_12(%arg0: i32, %arg1: memref<8xi32, #tpu.memory_space<smem>>) -> (i32, i32) {
    %c0_i32 = arith.constant 0 : i32
    %c0_i32_0 = arith.constant 0 : i32
    %c0_i32_1 = arith.constant 0 : i32
    return %c0_i32, %c0_i32_0 : i32, i32
  }
}

</mosaic_0001>

<llo_original>
// kernel: core_personality_forward.1
$region0: #{core_personality_forward.1}
  #allocation0 [shape = 'u32[]', space=smem, size = 0x4, offset = 0x4, fixed_abs, tag = 'smem constant byte address 0x4 - core index']
  #allocation1 [shape = 'u32[144,128]{1,0:T(1,128)}', space=vmem, size = 0x12000, scoped, tag = 'internal scratch']
  #allocation2 [shape = 'f32[8,128]{1,0:T(8,128)}', space=vmem, size = 0x1000, scoped, tag = 'scratch operand']
  #allocation3 [shape = 's32[8]{0}', space=sflag, size = 0x20, scoped, tag = 'scratch operand']
  #allocation4 [shape = 's32[1]{0}', space=sflag, size = 0x4, scoped, tag = 'scoped memory for core_personality_forward.1']
  #allocation5 [shape = 'u8[512]{0}', space=smem, size = 0x200, scoped, tag = 'prefetched SMEM operand 0']
  #allocation6 [shape = 's32[]', space=sflag, size = 0x4, offset = 0, fixed_abs, tag = 'sflag constant byte address 0x0 - dummy sync flag']
  #allocation7 [shape = 's32[]', space=sflag, size = 0x4, offset = 0, fixed_abs, tag = 'sflag constant byte address 0x0 - dummy sync flag']
  #allocation8 [shape = 's32[]', space=sflag, size = 0x4, offset = 0, fixed_abs, tag = 'sflag constant byte address 0x0 - dummy sync flag']
  #allocation9 [shape = 's32[]', space=sflag, size = 0x4, offset = 0, fixed_abs, tag = 'sflag constant byte address 0x0 - dummy sync flag']
  #allocation10 [shape = 's32[]', space=sflag, size = 0x4, offset = 0, fixed_abs, tag = 'sflag constant byte address 0x0 - dummy sync flag']
  #allocation11 [shape = 's32[]', space=sflag, size = 0x4, offset = 0, fixed_abs, tag = 'sflag constant byte address 0x0 - dummy sync flag']
  #allocation12 [shape = 's32[]', space=sflag, size = 0x4, offset = 0, fixed_abs, tag = 'sflag constant byte address 0x0 - dummy sync flag']
  #allocation13 [shape = 's32[]', space=sflag, size = 0x4, offset = 0, fixed_abs, tag = 'sflag constant byte address 0x0 - dummy sync flag']
  %s0 = inlined_call_operand.vmem [shape: s32[8], index: 0, kind: input, shape index: {}]
  %s1 = inlined_call_operand.vmem [shape: f32[64,128], index: 1, kind: input, shape index: {}]
  %s2 = inlined_call_operand.vmem [shape: f32[1,128], index: 2, kind: input, shape index: {}]
  %s3 = inlined_call_operand.vmem [shape: f32[1,128], index: 3, kind: input, shape index: {}]
  %s4 = inlined_call_operand.vmem [shape: bf16[128,64], index: 4, kind: input, shape index: {}]
  %s5 = inlined_call_operand.vmem [shape: f32[1,64], index: 5, kind: input, shape index: {}]
  %s6 = inlined_call_operand.vmem [shape: bf16[64,128], index: 6, kind: input, shape index: {}]
  %s7 = inlined_call_operand.vmem [shape: f32[1,128], index: 7, kind: input, shape index: {}]
  %s8 = inlined_call_operand.vmem [shape: f32[1,128], index: 8, kind: input, shape index: {}]
  %s9 = inlined_call_operand.vmem [shape: bf16[128,64], index: 9, kind: input, shape index: {}]
  %s10 = inlined_call_operand.vmem [shape: f32[1,64], index: 10, kind: input, shape index: {}]
  %s11 = inlined_call_operand.vmem [shape: bf16[64,128], index: 11, kind: input, shape index: {}]
  %s12 = inlined_call_operand.vmem [shape: f32[1,128], index: 12, kind: input, shape index: {}]
  %s13 = inlined_call_operand.vmem [shape: f32[8,128], index: 13, kind: output, shape index: {}]
  %s14 = sld [smem:[#allocation0]]
  $region294: #{core_personality_forward.1} parent=0
    _
  %s16 = ssub.s32 1, %s14
  %s17 = scalar_select 0, %s16, %s14
  %s18 = sshll.u32 %s0, 4
  %s19 = int_to_ptr.vmem [resolvable:$true] %s18
  %21 = dma.vmem_to_smem %s19, 16, [#allocation5], [#allocation4]
  %22 = dma.done [#allocation4], 16
  %23 = sfence
  // Predicated region
  $region2: #{core_personality_forward.1} parent=0 // pred_check
    _
  $region3: #{core_personality_forward.1} parent=0 // pred_check_branch
    %25 = sbr.rel (0) target = $region5
  $region4: #{core_personality_forward.1} parent=0 // pred_region
    _
  $region5: #{core_personality_forward.1} parent=0 // pred_fallthru
    _
  // Predicated region
  $region6: #{core_personality_forward.1} parent=0 // pred_check
    _
  $region7: #{core_personality_forward.1} parent=0 // pred_check_branch
    %27 = sbr.rel (0) target = $region9
  $region8: #{core_personality_forward.1} parent=0 // pred_region
    _
  $region9: #{core_personality_forward.1} parent=0 // pred_fallthru
    _
  // Predicated region
  $region10: #{core_personality_forward.1} parent=0 // pred_check
    _
  $region11: #{core_personality_forward.1} parent=0 // pred_check_branch
    %29 = sbr.rel (0) target = $region13
  $region12: #{core_personality_forward.1} parent=0 // pred_region
    _
  $region13: #{core_personality_forward.1} parent=0 // pred_fallthru
    _
  // Predicated region
  $region14: #{core_personality_forward.1} parent=0 // pred_check
    _
  $region15: #{core_personality_forward.1} parent=0 // pred_check_branch
    %31 = sbr.rel (0) target = $region17
  $region16: #{core_personality_forward.1} parent=0 // pred_region
    _
  $region17: #{core_personality_forward.1} parent=0 // pred_fallthru
    _
  // Predicated region
  $region18: #{core_personality_forward.1} parent=0 // pred_check
    _
  $region19: #{core_personality_forward.1} parent=0 // pred_check_branch
    %33 = sbr.rel (0) target = $region21
  $region20: #{core_personality_forward.1} parent=0 // pred_region
    _
  $region21: #{core_personality_forward.1} parent=0 // pred_fallthru
    _
  // Predicated region
  $region22: #{core_personality_forward.1} parent=0 // pred_check
    _
  $region23: #{core_personality_forward.1} parent=0 // pred_check_branch
    %35 = sbr.rel (0) target = $region25
  $region24: #{core_personality_forward.1} parent=0 // pred_region
    _
  $region25: #{core_personality_forward.1} parent=0 // pred_fallthru
    _
  // Predicated region
  $region26: #{core_personality_forward.1} parent=0 // pred_check
    _
  $region27: #{core_personality_forward.1} parent=0 // pred_check_branch
    %37 = sbr.rel (0) target = $region29
  $region28: #{core_personality_forward.1} parent=0 // pred_region
    _
  $region29: #{core_personality_forward.1} parent=0 // pred_fallthru
    _
  // Predicated region
  $region30: #{core_personality_forward.1} parent=0 // pred_check
    _
  $region31: #{core_personality_forward.1} parent=0 // pred_check_branch
    %39 = sbr.rel (0) target = $region33
  $region32: #{core_personality_forward.1} parent=0 // pred_region
    _
  $region33: #{core_personality_forward.1} parent=0 // pred_fallthru
    _
  // Predicated region
  $region34: #{core_personality_forward.1} parent=0 // pred_check
    _
  $region35: #{core_personality_forward.1} parent=0 // pred_check_branch
    %41 = sbr.rel (0) target = $region37
  $region36: #{core_personality_forward.1} parent=0 // pred_region
    _
  $region37: #{core_personality_forward.1} parent=0 // pred_fallthru
    _
  // Predicated region
  $region38: #{core_personality_forward.1} parent=0 // pred_check
    _
  $region39: #{core_personality_forward.1} parent=0 // pred_check_branch
    %43 = sbr.rel (0) target = $region41
  $region40: #{core_personality_forward.1} parent=0 // pred_region
    _
  $region41: #{core_personality_forward.1} parent=0 // pred_fallthru
    _
  // Predicated region
  $region42: #{core_personality_forward.1} parent=0 // pred_check
    _
  $region43: #{core_personality_forward.1} parent=0 // pred_check_branch
    %45 = sbr.rel (0) target = $region45
  $region44: #{core_personality_forward.1} parent=0 // pred_region
    _
  $region45: #{core_personality_forward.1} parent=0 // pred_fallthru
    _
  %s47 = sld [smem:[#allocation5]]
  %s48 = scalar_lea.vmem %s1, %s47
  %p50 = scmp.lt.u32.totalorder 1, 8
  %p51 = pneg %p50
  // Predicated region
  $region46: #{core_personality_forward.1} parent=0 // pred_check
    _
  $region47: #{core_personality_forward.1} parent=0 // pred_check_branch
    %53 = sbr.rel (%p50) target = $region49
  $region48: #{core_personality_forward.1} parent=0 // pred_region
    %s69 = sand.u32 1, 7
    %p70 = scmp.eq.s32.totalorder %s69, 0
    %p71 = pneg %p70
    // Predicated region
    $region61: #{core_personality_forward.1} parent=48 // pred_check
      _
    $region62: #{core_personality_forward.1} parent=48 // pred_check_branch
      %73 = sbr.rel (%p70) target = $region64
    $region63: #{core_personality_forward.1} parent=48 // pred_region
      %s74 = sand.u32 1, 7
      %s75 = ssub.s32 1, %s74
      %s76 = scalar_lea.vmem %s48, %s75
      %s77 = ssub.s32 1, %s74
      %s78 = scalar_lea.vmem [#allocation2], %s77
      %s79 = sshll.u32 1, %s74
      %s80 = ssub.s32 %s79, 1
      loop: start=0, step=1, limit=1
      $region65: #{core_personality_forward.1} parent=63 // loop_pre_header
        _
      $region66: #{core_personality_forward.1} parent=63 // loop_header
        %s82 = sphi 0, %s86
        %p83 = scmp.ge.s32.totalorder %s82, 1
        %s87 = sphi %s76, %s76
        %s88 = sphi %s78, %s78
      $region67: #{core_personality_forward.1} parent=63 // loop_header_branch
        %85 = sbr.rel (%p83) target = $region71
      $region68: #{core_personality_forward.1} parent=63 // loop_body
        %v89 = vld [vmem:[%s87] sm:%s80]
        %90 = vst [vmem:[%s88] sm:%s80] %v89
      $region69: #{core_personality_forward.1} parent=63 // loop_footer
        %s86 = sadd.s32 1, %s82
      $region70: #{core_personality_forward.1} parent=63 // loop_footer_branch
        %81 = sbr.rel target = $region66
      $region71: #{core_personality_forward.1} parent=63 // loop_exit
        _
    $region64: #{core_personality_forward.1} parent=48 // pred_fallthru
      _
  $region49: #{core_personality_forward.1} parent=0 // pred_fallthru
    _
  // Predicated region
  $region50: #{core_personality_forward.1} parent=0 // pred_check
    %p54 = pneg %p50
  $region51: #{core_personality_forward.1} parent=0 // pred_check_branch
    %56 = sbr.rel (%p54) target = $region53
  $region52: #{core_personality_forward.1} parent=0 // pred_region
    %s57 = sshll.u32 1, 1
    %s58 = ssub.s32 %s57, 1
    loop: start=0, step=1, limit=1
    $region54: #{core_personality_forward.1} parent=52 // loop_pre_header
      _
    $region55: #{core_personality_forward.1} parent=52 // loop_header
      %s60 = sphi 0, %s64
      %p61 = scmp.ge.s32.totalorder %s60, 1
      %s65 = sphi %s48, %s48
      %s66 = sphi [#allocation2], [#allocation2]
    $region56: #{core_personality_forward.1} parent=52 // loop_header_branch
      %63 = sbr.rel (%p61) target = $region60
    $region57: #{core_personality_forward.1} parent=52 // loop_body
      %v67 = vld [vmem:[%s65] sm:%s58]
      %68 = vst [vmem:[%s66] sm:%s58] %v67
    $region58: #{core_personality_forward.1} parent=52 // loop_footer
      %s64 = sadd.s32 1, %s60
    $region59: #{core_personality_forward.1} parent=52 // loop_footer_branch
      %59 = sbr.rel target = $region55
    $region60: #{core_personality_forward.1} parent=52 // loop_exit
      _
  $region53: #{core_personality_forward.1} parent=0 // pred_fallthru
    _
  // Predicated region
  $region72: #{core_personality_forward.1} parent=0 // pred_check
    _
  $region73: #{core_personality_forward.1} parent=0 // pred_check_branch
    %93 = sbr.rel (0) target = $region75
  $region74: #{core_personality_forward.1} parent=0 // pred_region
    %94 = vsyncadd [#allocation3], 16
  $region75: #{core_personality_forward.1} parent=0 // pred_fallthru
    _
  %s95 = sld [smem:[#allocation5 + $0x1]]
  %s96 = scalar_lea.vmem %s1, %s95
  %s97 = scalar_lea.vmem [#allocation2], 1
  %s98 = scalar_lea.sflag [#allocation3], 1
  %p100 = scmp.lt.u32.totalorder 1, 8
  %p101 = pneg %p100
  // Predicated region
  $region76: #{core_personality_forward.1} parent=0 // pred_check
    _
  $region77: #{core_personality_forward.1} parent=0 // pred_check_branch
    %103 = sbr.rel (%p100) target = $region79
  $region78: #{core_personality_forward.1} parent=0 // pred_region
    %s119 = sand.u32 1, 7
    %p120 = scmp.eq.s32.totalorder %s119, 0
    %p121 = pneg %p120
    // Predicated region
    $region91: #{core_personality_forward.1} parent=78 // pred_check
      _
    $region92: #{core_personality_forward.1} parent=78 // pred_check_branch
      %123 = sbr.rel (%p120) target = $region94
    $region93: #{core_personality_forward.1} parent=78 // pred_region
      %s124 = sand.u32 1, 7
      %s125 = ssub.s32 1, %s124
      %s126 = scalar_lea.vmem %s96, %s125
      %s127 = ssub.s32 1, %s124
      %s128 = scalar_lea.vmem %s97, %s127 [#allocation2]
      %s129 = sshll.u32 1, %s124
      %s130 = ssub.s32 %s129, 1
      loop: start=0, step=1, limit=1
      $region95: #{core_personality_forward.1} parent=93 // loop_pre_header
        _
      $region96: #{core_personality_forward.1} parent=93 // loop_header
        %s132 = sphi 0, %s136
        %p133 = scmp.ge.s32.totalorder %s132, 1
        %s137 = sphi %s126, %s126
        %s138 = sphi %s128, %s128
      $region97: #{core_personality_forward.1} parent=93 // loop_header_branch
        %135 = sbr.rel (%p133) target = $region101
      $region98: #{core_personality_forward.1} parent=93 // loop_body
        %v139 = vld [vmem:[%s137] sm:%s130]
        %140 = vst [vmem:[%s138] sm:%s130] %v139
      $region99: #{core_personality_forward.1} parent=93 // loop_footer
        %s136 = sadd.s32 1, %s132
      $region100: #{core_personality_forward.1} parent=93 // loop_footer_branch
        %131 = sbr.rel target = $region96
      $region101: #{core_personality_forward.1} parent=93 // loop_exit
        _
    $region94: #{core_personality_forward.1} parent=78 // pred_fallthru
      _
  $region79: #{core_personality_forward.1} parent=0 // pred_fallthru
    _
  // Predicated region
  $region80: #{core_personality_forward.1} parent=0 // pred_check
    %p104 = pneg %p100
  $region81: #{core_personality_forward.1} parent=0 // pred_check_branch
    %106 = sbr.rel (%p104) target = $region83
  $region82: #{core_personality_forward.1} parent=0 // pred_region
    %s107 = sshll.u32 1, 1
    %s108 = ssub.s32 %s107, 1
    loop: start=0, step=1, limit=1
    $region84: #{core_personality_forward.1} parent=82 // loop_pre_header
      _
    $region85: #{core_personality_forward.1} parent=82 // loop_header
      %s110 = sphi 0, %s114
      %p111 = scmp.ge.s32.totalorder %s110, 1
      %s115 = sphi %s96, %s96
      %s116 = sphi %s97, %s97
    $region86: #{core_personality_forward.1} parent=82 // loop_header_branch
      %113 = sbr.rel (%p111) target = $region90
    $region87: #{core_personality_forward.1} parent=82 // loop_body
      %v117 = vld [vmem:[%s115] sm:%s108]
      %118 = vst [vmem:[%s116] sm:%s108] %v117
    $region88: #{core_personality_forward.1} parent=82 // loop_footer
      %s114 = sadd.s32 1, %s110
    $region89: #{core_personality_forward.1} parent=82 // loop_footer_branch
      %109 = sbr.rel target = $region85
    $region90: #{core_personality_forward.1} parent=82 // loop_exit
      _
  $region83: #{core_personality_forward.1} parent=0 // pred_fallthru
    _
  // Predicated region
  $region102: #{core_personality_forward.1} parent=0 // pred_check
    _
  $region103: #{core_personality_forward.1} parent=0 // pred_check_branch
    %143 = sbr.rel (0) target = $region105
  $region104: #{core_personality_forward.1} parent=0 // pred_region
    %144 = vsyncadd %s98, 16
  $region105: #{core_personality_forward.1} parent=0 // pred_fallthru
    _
  %s145 = sld [smem:[#allocation5 + $0x2]]
  %s146 = scalar_lea.vmem %s1, %s145
  %s147 = scalar_lea.vmem [#allocation2], 2
  %s148 = scalar_lea.sflag [#allocation3], 2
  %p150 = scmp.lt.u32.totalorder 1, 8
  %p151 = pneg %p150
  // Predicated region
  $region106: #{core_personality_forward.1} parent=0 // pred_check
    _
  $region107: #{core_personality_forward.1} parent=0 // pred_check_branch
    %153 = sbr.rel (%p150) target = $region109
  $region108: #{core_personality_forward.1} parent=0 // pred_region
    %s169 = sand.u32 1, 7
    %p170 = scmp.eq.s32.totalorder %s169, 0
    %p171 = pneg %p170
    // Predicated region
    $region121: #{core_personality_forward.1} parent=108 // pred_check
      _
    $region122: #{core_personality_forward.1} parent=108 // pred_check_branch
      %173 = sbr.rel (%p170) target = $region124
    $region123: #{core_personality_forward.1} parent=108 // pred_region
      %s174 = sand.u32 1, 7
      %s175 = ssub.s32 1, %s174
      %s176 = scalar_lea.vmem %s146, %s175
      %s177 = ssub.s32 1, %s174
      %s178 = scalar_lea.vmem %s147, %s177 [#allocation2]
      %s179 = sshll.u32 1, %s174
      %s180 = ssub.s32 %s179, 1
      loop: start=0, step=1, limit=1
      $region125: #{core_personality_forward.1} parent=123 // loop_pre_header
        _
      $region126: #{core_personality_forward.1} parent=123 // loop_header
        %s182 = sphi 0, %s186
        %p183 = scmp.ge.s32.totalorder %s182, 1
        %s187 = sphi %s176, %s176
        %s188 = sphi %s178, %s178
      $region127: #{core_personality_forward.1} parent=123 // loop_header_branch
        %185 = sbr.rel (%p183) target = $region131
      $region128: #{core_personality_forward.1} parent=123 // loop_body
        %v189 = vld [vmem:[%s187] sm:%s180]
        %190 = vst [vmem:[%s188] sm:%s180] %v189
      $region129: #{core_personality_forward.1} parent=123 // loop_footer
        %s186 = sadd.s32 1, %s182
      $region130: #{core_personality_forward.1} parent=123 // loop_footer_branch
        %181 = sbr.rel target = $region126
      $region131: #{core_personality_forward.1} parent=123 // loop_exit
        _
    $region124: #{core_personality_forward.1} parent=108 // pred_fallthru
      _
  $region109: #{core_personality_forward.1} parent=0 // pred_fallthru
    _
  // Predicated region
  $region110: #{core_personality_forward.1} parent=0 // pred_check
    %p154 = pneg %p150
  $region111: #{core_personality_forward.1} parent=0 // pred_check_branch
    %156 = sbr.rel (%p154) target = $region113
  $region112: #{core_personality_forward.1} parent=0 // pred_region
    %s157 = sshll.u32 1, 1
    %s158 = ssub.s32 %s157, 1
    loop: start=0, step=1, limit=1
    $region114: #{core_personality_forward.1} parent=112 // loop_pre_header
      _
    $region115: #{core_personality_forward.1} parent=112 // loop_header
      %s160 = sphi 0, %s164
      %p161 = scmp.ge.s32.totalorder %s160, 1
      %s165 = sphi %s146, %s146
      %s166 = sphi %s147, %s147
    $region116: #{core_personality_forward.1} parent=112 // loop_header_branch
      %163 = sbr.rel (%p161) target = $region120
    $region117: #{core_personality_forward.1} parent=112 // loop_body
      %v167 = vld [vmem:[%s165] sm:%s158]
      %168 = vst [vmem:[%s166] sm:%s158] %v167
    $region118: #{core_personality_forward.1} parent=112 // loop_footer
      %s164 = sadd.s32 1, %s160
    $region119: #{core_personality_forward.1} parent=112 // loop_footer_branch
      %159 = sbr.rel target = $region115
    $region120: #{core_personality_forward.1} parent=112 // loop_exit
      _
  $region113: #{core_personality_forward.1} parent=0 // pred_fallthru
    _
  // Predicated region
  $region132: #{core_personality_forward.1} parent=0 // pred_check
    _
  $region133: #{core_personality_forward.1} parent=0 // pred_check_branch
    %193 = sbr.rel (0) target = $region135
  $region134: #{core_personality_forward.1} parent=0 // pred_region
    %194 = vsyncadd %s148, 16
  $region135: #{core_personality_forward.1} parent=0 // pred_fallthru
    _
  %s195 = sld [smem:[#allocation5 + $0x3]]
  %s196 = scalar_lea.vmem %s1, %s195
  %s197 = scalar_lea.vmem [#allocation2], 3
  %s198 = scalar_lea.sflag [#allocation3], 3
  %p200 = scmp.lt.u32.totalorder 1, 8
  %p201 = pneg %p200
  // Predicated region
  $region136: #{core_personality_forward.1} parent=0 // pred_check
    _
  $region137: #{core_personality_forward.1} parent=0 // pred_check_branch
    %203 = sbr.rel (%p200) target = $region139
  $region138: #{core_personality_forward.1} parent=0 // pred_region
    %s219 = sand.u32 1, 7
    %p220 = scmp.eq.s32.totalorder %s219, 0
    %p221 = pneg %p220
    // Predicated region
    $region151: #{core_personality_forward.1} parent=138 // pred_check
      _
    $region152: #{core_personality_forward.1} parent=138 // pred_check_branch
      %223 = sbr.rel (%p220) target = $region154
    $region153: #{core_personality_forward.1} parent=138 // pred_region
      %s224 = sand.u32 1, 7
      %s225 = ssub.s32 1, %s224
      %s226 = scalar_lea.vmem %s196, %s225
      %s227 = ssub.s32 1, %s224
      %s228 = scalar_lea.vmem %s197, %s227 [#allocation2]
      %s229 = sshll.u32 1, %s224
      %s230 = ssub.s32 %s229, 1
      loop: start=0, step=1, limit=1
      $region155: #{core_personality_forward.1} parent=153 // loop_pre_header
        _
      $region156: #{core_personality_forward.1} parent=153 // loop_header
        %s232 = sphi 0, %s236
        %p233 = scmp.ge.s32.totalorder %s232, 1
        %s237 = sphi %s226, %s226
        %s238 = sphi %s228, %s228
      $region157: #{core_personality_forward.1} parent=153 // loop_header_branch
        %235 = sbr.rel (%p233) target = $region161
      $region158: #{core_personality_forward.1} parent=153 // loop_body
        %v239 = vld [vmem:[%s237] sm:%s230]
        %240 = vst [vmem:[%s238] sm:%s230] %v239
      $region159: #{core_personality_forward.1} parent=153 // loop_footer
        %s236 = sadd.s32 1, %s232
      $region160: #{core_personality_forward.1} parent=153 // loop_footer_branch
        %231 = sbr.rel target = $region156
      $region161: #{core_personality_forward.1} parent=153 // loop_exit
        _
    $region154: #{core_personality_forward.1} parent=138 // pred_fallthru
      _
  $region139: #{core_personality_forward.1} parent=0 // pred_fallthru
    _
  // Predicated region
  $region140: #{core_personality_forward.1} parent=0 // pred_check
    %p204 = pneg %p200
  $region141: #{core_personality_forward.1} parent=0 // pred_check_branch
    %206 = sbr.rel (%p204) target = $region143
  $region142: #{core_personality_forward.1} parent=0 // pred_region
    %s207 = sshll.u32 1, 1
    %s208 = ssub.s32 %s207, 1
    loop: start=0, step=1, limit=1
    $region144: #{core_personality_forward.1} parent=142 // loop_pre_header
      _
    $region145: #{core_personality_forward.1} parent=142 // loop_header
      %s210 = sphi 0, %s214
      %p211 = scmp.ge.s32.totalorder %s210, 1
      %s215 = sphi %s196, %s196
      %s216 = sphi %s197, %s197
    $region146: #{core_personality_forward.1} parent=142 // loop_header_branch
      %213 = sbr.rel (%p211) target = $region150
    $region147: #{core_personality_forward.1} parent=142 // loop_body
      %v217 = vld [vmem:[%s215] sm:%s208]
      %218 = vst [vmem:[%s216] sm:%s208] %v217
    $region148: #{core_personality_forward.1} parent=142 // loop_footer
      %s214 = sadd.s32 1, %s210
    $region149: #{core_personality_forward.1} parent=142 // loop_footer_branch
      %209 = sbr.rel target = $region145
    $region150: #{core_personality_forward.1} parent=142 // loop_exit
      _
  $region143: #{core_personality_forward.1} parent=0 // pred_fallthru
    _
  // Predicated region
  $region162: #{core_personality_forward.1} parent=0 // pred_check
    _
  $region163: #{core_personality_forward.1} parent=0 // pred_check_branch
    %243 = sbr.rel (0) target = $region165
  $region164: #{core_personality_forward.1} parent=0 // pred_region
    %244 = vsyncadd %s198, 16
  $region165: #{core_personality_forward.1} parent=0 // pred_fallthru
    _
  %s245 = sld [smem:[#allocation5 + $0x4]]
  %s246 = scalar_lea.vmem %s1, %s245
  %s247 = scalar_lea.vmem [#allocation2], 4
  %s248 = scalar_lea.sflag [#allocation3], 4
  %p250 = scmp.lt.u32.totalorder 1, 8
  %p251 = pneg %p250
  // Predicated region
  $region166: #{core_personality_forward.1} parent=0 // pred_check
    _
  $region167: #{core_personality_forward.1} parent=0 // pred_check_branch
    %253 = sbr.rel (%p250) target = $region169
  $region168: #{core_personality_forward.1} parent=0 // pred_region
    %s269 = sand.u32 1, 7
    %p270 = scmp.eq.s32.totalorder %s269, 0
    %p271 = pneg %p270
    // Predicated region
    $region181: #{core_personality_forward.1} parent=168 // pred_check
      _
    $region182: #{core_personality_forward.1} parent=168 // pred_check_branch
      %273 = sbr.rel (%p270) target = $region184
    $region183: #{core_personality_forward.1} parent=168 // pred_region
      %s274 = sand.u32 1, 7
      %s275 = ssub.s32 1, %s274
      %s276 = scalar_lea.vmem %s246, %s275
      %s277 = ssub.s32 1, %s274
      %s278 = scalar_lea.vmem %s247, %s277 [#allocation2]
      %s279 = sshll.u32 1, %s274
      %s280 = ssub.s32 %s279, 1
      loop: start=0, step=1, limit=1
      $region185: #{core_personality_forward.1} parent=183 // loop_pre_header
        _
      $region186: #{core_personality_forward.1} parent=183 // loop_header
        %s282 = sphi 0, %s286
        %p283 = scmp.ge.s32.totalorder %s282, 1
        %s287 = sphi %s276, %s276
        %s288 = sphi %s278, %s278
      $region187: #{core_personality_forward.1} parent=183 // loop_header_branch
        %285 = sbr.rel (%p283) target = $region191
      $region188: #{core_personality_forward.1} parent=183 // loop_body
        %v289 = vld [vmem:[%s287] sm:%s280]
        %290 = vst [vmem:[%s288] sm:%s280] %v289
      $region189: #{core_personality_forward.1} parent=183 // loop_footer
        %s286 = sadd.s32 1, %s282
      $region190: #{core_personality_forward.1} parent=183 // loop_footer_branch
        %281 = sbr.rel target = $region186
      $region191: #{core_personality_forward.1} parent=183 // loop_exit
        _
    $region184: #{core_personality_forward.1} parent=168 // pred_fallthru
      _
  $region169: #{core_personality_forward.1} parent=0 // pred_fallthru
    _
  // Predicated region
  $region170: #{core_personality_forward.1} parent=0 // pred_check
    %p254 = pneg %p250
  $region171: #{core_personality_forward.1} parent=0 // pred_check_branch
    %256 = sbr.rel (%p254) target = $region173
  $region172: #{core_personality_forward.1} parent=0 // pred_region
    %s257 = sshll.u32 1, 1
    %s258 = ssub.s32 %s257, 1
    loop: start=0, step=1, limit=1
    $region174: #{core_personality_forward.1} parent=172 // loop_pre_header
      _
    $region175: #{core_personality_forward.1} parent=172 // loop_header
      %s260 = sphi 0, %s264
      %p261 = scmp.ge.s32.totalorder %s260, 1
      %s265 = sphi %s246, %s246
      %s266 = sphi %s247, %s247
    $region176: #{core_personality_forward.1} parent=172 // loop_header_branch
      %263 = sbr.rel (%p261) target = $region180
    $region177: #{core_personality_forward.1} parent=172 // loop_body
      %v267 = vld [vmem:[%s265] sm:%s258]
      %268 = vst [vmem:[%s266] sm:%s258] %v267
    $region178: #{core_personality_forward.1} parent=172 // loop_footer
      %s264 = sadd.s32 1, %s260
    $region179: #{core_personality_forward.1} parent=172 // loop_footer_branch
      %259 = sbr.rel target = $region175
    $region180: #{core_personality_forward.1} parent=172 // loop_exit
      _
  $region173: #{core_personality_forward.1} parent=0 // pred_fallthru
    _
  // Predicated region
  $region192: #{core_personality_forward.1} parent=0 // pred_check
    _
  $region193: #{core_personality_forward.1} parent=0 // pred_check_branch
    %293 = sbr.rel (0) target = $region195
  $region194: #{core_personality_forward.1} parent=0 // pred_region
    %294 = vsyncadd %s248, 16
  $region195: #{core_personality_forward.1} parent=0 // pred_fallthru
    _
  %s295 = sld [smem:[#allocation5 + $0x5]]
  %s296 = scalar_lea.vmem %s1, %s295
  %s297 = scalar_lea.vmem [#allocation2], 5
  %s298 = scalar_lea.sflag [#allocation3], 5
  %p300 = scmp.lt.u32.totalorder 1, 8
  %p301 = pneg %p300
  // Predicated region
  $region196: #{core_personality_forward.1} parent=0 // pred_check
    _
  $region197: #{core_personality_forward.1} parent=0 // pred_check_branch
    %303 = sbr.rel (%p300) target = $region199
  $region198: #{core_personality_forward.1} parent=0 // pred_region
    %s319 = sand.u32 1, 7
    %p320 = scmp.eq.s32.totalorder %s319, 0
    %p321 = pneg %p320
    // Predicated region
    $region211: #{core_personality_forward.1} parent=198 // pred_check
      _
    $region212: #{core_personality_forward.1} parent=198 // pred_check_branch
      %323 = sbr.rel (%p320) target = $region214
    $region213: #{core_personality_forward.1} parent=198 // pred_region
      %s324 = sand.u32 1, 7
      %s325 = ssub.s32 1, %s324
      %s326 = scalar_lea.vmem %s296, %s325
      %s327 = ssub.s32 1, %s324
      %s328 = scalar_lea.vmem %s297, %s327 [#allocation2]
      %s329 = sshll.u32 1, %s324
      %s330 = ssub.s32 %s329, 1
      loop: start=0, step=1, limit=1
      $region215: #{core_personality_forward.1} parent=213 // loop_pre_header
        _
      $region216: #{core_personality_forward.1} parent=213 // loop_header
        %s332 = sphi 0, %s336
        %p333 = scmp.ge.s32.totalorder %s332, 1
        %s337 = sphi %s326, %s326
        %s338 = sphi %s328, %s328
      $region217: #{core_personality_forward.1} parent=213 // loop_header_branch
        %335 = sbr.rel (%p333) target = $region221
      $region218: #{core_personality_forward.1} parent=213 // loop_body
        %v339 = vld [vmem:[%s337] sm:%s330]
        %340 = vst [vmem:[%s338] sm:%s330] %v339
      $region219: #{core_personality_forward.1} parent=213 // loop_footer
        %s336 = sadd.s32 1, %s332
      $region220: #{core_personality_forward.1} parent=213 // loop_footer_branch
        %331 = sbr.rel target = $region216
      $region221: #{core_personality_forward.1} parent=213 // loop_exit
        _
    $region214: #{core_personality_forward.1} parent=198 // pred_fallthru
      _
  $region199: #{core_personality_forward.1} parent=0 // pred_fallthru
    _
  // Predicated region
  $region200: #{core_personality_forward.1} parent=0 // pred_check
    %p304 = pneg %p300
  $region201: #{core_personality_forward.1} parent=0 // pred_check_branch
    %306 = sbr.rel (%p304) target = $region203
  $region202: #{core_personality_forward.1} parent=0 // pred_region
    %s307 = sshll.u32 1, 1
    %s308 = ssub.s32 %s307, 1
    loop: start=0, step=1, limit=1
    $region204: #{core_personality_forward.1} parent=202 // loop_pre_header
      _
    $region205: #{core_personality_forward.1} parent=202 // loop_header
      %s310 = sphi 0, %s314
      %p311 = scmp.ge.s32.totalorder %s310, 1
      %s315 = sphi %s296, %s296
      %s316 = sphi %s297, %s297
    $region206: #{core_personality_forward.1} parent=202 // loop_header_branch
      %313 = sbr.rel (%p311) target = $region210
    $region207: #{core_personality_forward.1} parent=202 // loop_body
      %v317 = vld [vmem:[%s315] sm:%s308]
      %318 = vst [vmem:[%s316] sm:%s308] %v317
    $region208: #{core_personality_forward.1} parent=202 // loop_footer
      %s314 = sadd.s32 1, %s310
    $region209: #{core_personality_forward.1} parent=202 // loop_footer_branch
      %309 = sbr.rel target = $region205
    $region210: #{core_personality_forward.1} parent=202 // loop_exit
      _
  $region203: #{core_personality_forward.1} parent=0 // pred_fallthru
    _
  // Predicated region
  $region222: #{core_personality_forward.1} parent=0 // pred_check
    _
  $region223: #{core_personality_forward.1} parent=0 // pred_check_branch
    %343 = sbr.rel (0) target = $region225
  $region224: #{core_personality_forward.1} parent=0 // pred_region
    %344 = vsyncadd %s298, 16
  $region225: #{core_personality_forward.1} parent=0 // pred_fallthru
    _
  %s345 = sld [smem:[#allocation5 + $0x6]]
  %s346 = scalar_lea.vmem %s1, %s345
  %s347 = scalar_lea.vmem [#allocation2], 6
  %s348 = scalar_lea.sflag [#allocation3], 6
  %p350 = scmp.lt.u32.totalorder 1, 8
  %p351 = pneg %p350
  // Predicated region
  $region226: #{core_personality_forward.1} parent=0 // pred_check
    _
  $region227: #{core_personality_forward.1} parent=0 // pred_check_branch
    %353 = sbr.rel (%p350) target = $region229
  $region228: #{core_personality_forward.1} parent=0 // pred_region
    %s369 = sand.u32 1, 7
    %p370 = scmp.eq.s32.totalorder %s369, 0
    %p371 = pneg %p370
    // Predicated region
    $region241: #{core_personality_forward.1} parent=228 // pred_check
      _
    $region242: #{core_personality_forward.1} parent=228 // pred_check_branch
      %373 = sbr.rel (%p370) target = $region244
    $region243: #{core_personality_forward.1} parent=228 // pred_region
      %s374 = sand.u32 1, 7
      %s375 = ssub.s32 1, %s374
      %s376 = scalar_lea.vmem %s346, %s375
      %s377 = ssub.s32 1, %s374
      %s378 = scalar_lea.vmem %s347, %s377 [#allocation2]
      %s379 = sshll.u32 1, %s374
      %s380 = ssub.s32 %s379, 1
      loop: start=0, step=1, limit=1
      $region245: #{core_personality_forward.1} parent=243 // loop_pre_header
        _
      $region246: #{core_personality_forward.1} parent=243 // loop_header
        %s382 = sphi 0, %s386
        %p383 = scmp.ge.s32.totalorder %s382, 1
        %s387 = sphi %s376, %s376
        %s388 = sphi %s378, %s378
      $region247: #{core_personality_forward.1} parent=243 // loop_header_branch
        %385 = sbr.rel (%p383) target = $region251
      $region248: #{core_personality_forward.1} parent=243 // loop_body
        %v389 = vld [vmem:[%s387] sm:%s380]
        %390 = vst [vmem:[%s388] sm:%s380] %v389
      $region249: #{core_personality_forward.1} parent=243 // loop_footer
        %s386 = sadd.s32 1, %s382
      $region250: #{core_personality_forward.1} parent=243 // loop_footer_branch
        %381 = sbr.rel target = $region246
      $region251: #{core_personality_forward.1} parent=243 // loop_exit
        _
    $region244: #{core_personality_forward.1} parent=228 // pred_fallthru
      _
  $region229: #{core_personality_forward.1} parent=0 // pred_fallthru
    _
  // Predicated region
  $region230: #{core_personality_forward.1} parent=0 // pred_check
    %p354 = pneg %p350
  $region231: #{core_personality_forward.1} parent=0 // pred_check_branch
    %356 = sbr.rel (%p354) target = $region233
  $region232: #{core_personality_forward.1} parent=0 // pred_region
    %s357 = sshll.u32 1, 1
    %s358 = ssub.s32 %s357, 1
    loop: start=0, step=1, limit=1
    $region234: #{core_personality_forward.1} parent=232 // loop_pre_header
      _
    $region235: #{core_personality_forward.1} parent=232 // loop_header
      %s360 = sphi 0, %s364
      %p361 = scmp.ge.s32.totalorder %s360, 1
      %s365 = sphi %s346, %s346
      %s366 = sphi %s347, %s347
    $region236: #{core_personality_forward.1} parent=232 // loop_header_branch
      %363 = sbr.rel (%p361) target = $region240
    $region237: #{core_personality_forward.1} parent=232 // loop_body
      %v367 = vld [vmem:[%s365] sm:%s358]
      %368 = vst [vmem:[%s366] sm:%s358] %v367
    $region238: #{core_personality_forward.1} parent=232 // loop_footer
      %s364 = sadd.s32 1, %s360
    $region239: #{core_personality_forward.1} parent=232 // loop_footer_branch
      %359 = sbr.rel target = $region235
    $region240: #{core_personality_forward.1} parent=232 // loop_exit
      _
  $region233: #{core_personality_forward.1} parent=0 // pred_fallthru
    _
  // Predicated region
  $region252: #{core_personality_forward.1} parent=0 // pred_check
    _
  $region253: #{core_personality_forward.1} parent=0 // pred_check_branch
    %393 = sbr.rel (0) target = $region255
  $region254: #{core_personality_forward.1} parent=0 // pred_region
    %394 = vsyncadd %s348, 16
  $region255: #{core_personality_forward.1} parent=0 // pred_fallthru
    _
  %s395 = sld [smem:[#allocation5 + $0x7]]
  %s396 = scalar_lea.vmem %s1, %s395
  %s397 = scalar_lea.vmem [#allocation2], 7
  %s398 = scalar_lea.sflag [#allocation3], 7
  %p400 = scmp.lt.u32.totalorder 1, 8
  %p401 = pneg %p400
  // Predicated region
  $region256: #{core_personality_forward.1} parent=0 // pred_check
    _
  $region257: #{core_personality_forward.1} parent=0 // pred_check_branch
    %403 = sbr.rel (%p400) target = $region259
  $region258: #{core_personality_forward.1} parent=0 // pred_region
    %s419 = sand.u32 1, 7
    %p420 = scmp.eq.s32.totalorder %s419, 0
    %p421 = pneg %p420
    // Predicated region
    $region271: #{core_personality_forward.1} parent=258 // pred_check
      _
    $region272: #{core_personality_forward.1} parent=258 // pred_check_branch
      %423 = sbr.rel (%p420) target = $region274
    $region273: #{core_personality_forward.1} parent=258 // pred_region
      %s424 = sand.u32 1, 7
      %s425 = ssub.s32 1, %s424
      %s426 = scalar_lea.vmem %s396, %s425
      %s427 = ssub.s32 1, %s424
      %s428 = scalar_lea.vmem %s397, %s427 [#allocation2]
      %s429 = sshll.u32 1, %s424
      %s430 = ssub.s32 %s429, 1
      loop: start=0, step=1, limit=1
      $region275: #{core_personality_forward.1} parent=273 // loop_pre_header
        _
      $region276: #{core_personality_forward.1} parent=273 // loop_header
        %s432 = sphi 0, %s436
        %p433 = scmp.ge.s32.totalorder %s432, 1
        %s437 = sphi %s426, %s426
        %s438 = sphi %s428, %s428
      $region277: #{core_personality_forward.1} parent=273 // loop_header_branch
        %435 = sbr.rel (%p433) target = $region281
      $region278: #{core_personality_forward.1} parent=273 // loop_body
        %v439 = vld [vmem:[%s437] sm:%s430]
        %440 = vst [vmem:[%s438] sm:%s430] %v439
      $region279: #{core_personality_forward.1} parent=273 // loop_footer
        %s436 = sadd.s32 1, %s432
      $region280: #{core_personality_forward.1} parent=273 // loop_footer_branch
        %431 = sbr.rel target = $region276
      $region281: #{core_personality_forward.1} parent=273 // loop_exit
        _
    $region274: #{core_personality_forward.1} parent=258 // pred_fallthru
      _
  $region259: #{core_personality_forward.1} parent=0 // pred_fallthru
    _
  // Predicated region
  $region260: #{core_personality_forward.1} parent=0 // pred_check
    %p404 = pneg %p400
  $region261: #{core_personality_forward.1} parent=0 // pred_check_branch
    %406 = sbr.rel (%p404) target = $region263
  $region262: #{core_personality_forward.1} parent=0 // pred_region
    %s407 = sshll.u32 1, 1
    %s408 = ssub.s32 %s407, 1
    loop: start=0, step=1, limit=1
    $region264: #{core_personality_forward.1} parent=262 // loop_pre_header
      _
    $region265: #{core_personality_forward.1} parent=262 // loop_header
      %s410 = sphi 0, %s414
      %p411 = scmp.ge.s32.totalorder %s410, 1
      %s415 = sphi %s396, %s396
      %s416 = sphi %s397, %s397
    $region266: #{core_personality_forward.1} parent=262 // loop_header_branch
      %413 = sbr.rel (%p411) target = $region270
    $region267: #{core_personality_forward.1} parent=262 // loop_body
      %v417 = vld [vmem:[%s415] sm:%s408]
      %418 = vst [vmem:[%s416] sm:%s408] %v417
    $region268: #{core_personality_forward.1} parent=262 // loop_footer
      %s414 = sadd.s32 1, %s410
    $region269: #{core_personality_forward.1} parent=262 // loop_footer_branch
      %409 = sbr.rel target = $region265
    $region270: #{core_personality_forward.1} parent=262 // loop_exit
      _
  $region263: #{core_personality_forward.1} parent=0 // pred_fallthru
    _
  // Predicated region
  $region282: #{core_personality_forward.1} parent=0 // pred_check
    _
  $region283: #{core_personality_forward.1} parent=0 // pred_check_branch
    %443 = sbr.rel (0) target = $region285
  $region284: #{core_personality_forward.1} parent=0 // pred_region
    %444 = vsyncadd %s398, 16
  $region285: #{core_personality_forward.1} parent=0 // pred_fallthru
    _
  %s445 = smul.u32 1, 1
  %s446 = sshll.u32 %s445, 4
  %447 = dma.done [#allocation3], %s446
  %s448 = sshll.u32 %s445, 4
  %449 = dma.done %s98, %s448
  %s450 = sshll.u32 %s445, 4
  %451 = dma.done %s148, %s450
  %s452 = sshll.u32 %s445, 4
  %453 = dma.done %s198, %s452
  %s454 = sshll.u32 %s445, 4
  %455 = dma.done %s248, %s454
  %s456 = sshll.u32 %s445, 4
  %457 = dma.done %s298, %s456
  %s458 = sshll.u32 %s445, 4
  %459 = dma.done %s348, %s458
  %s460 = sshll.u32 %s445, 4
  %461 = dma.done %s398, %s460
  %v462 = vld [vmem:[#allocation2] sm:$0xff]
  %463 = vadd.xlane.f32.xlu0 %v462
  %v464 = vpop.xlane.xlu0 %463
  %v465 = vrcp.pop 128.0
  %v466 = vmul.f32 %v464, %v465
  %v467 = vsub.f32 %v462, %v466
  %v468 = vmul.f32 %v467, %v467
  %469 = vadd.xlane.f32.xlu0 %v468
  %v470 = vpop.xlane.xlu0 %469
  %v471 = vmul.f32 %v470, %v465
  %v472 = vadd.f32 %v471, 1e-05
  %v473 = vrsqrt.pop %v472
  %v474 = vmul.f32 %v467, %v473
  %v475 = vld [vmem:[%s2] sm:$0x1]
  %v477 = vlaneseq
  %v478 = vshrl.u32 %v477, 7
  %v479 = vsub.s32 0, %v478
  %v480 = vrot.slane %v475, %v479
  %v482 = vmul.f32 %v474, %v480
  %v483 = vld [vmem:[%s3] sm:$0x1]
  %v485 = vlaneseq
  %v486 = vshrl.u32 %v485, 7
  %v487 = vsub.s32 0, %v486
  %v488 = vrot.slane %v483, %v487
  %v490 = vadd.f32 %v482, %v488
  %v491 = vpack.c.bf16 %v490, %v490
  %v492 = vld [vmem:[%s4] sm:$0xf]
  %v493 = vld [vmem:[%s4 + $0x4] sm:$0xf]
  %v494 = vld [vmem:[%s4 + $0x8] sm:$0xf]
  %v495 = vld [vmem:[%s4 + $0xc] sm:$0xf]
  %v496 = vld [vmem:[%s4 + $0x10] sm:$0xf]
  %v497 = vld [vmem:[%s4 + $0x14] sm:$0xf]
  %v498 = vld [vmem:[%s4 + $0x18] sm:$0xf]
  %v499 = vld [vmem:[%s4 + $0x1c] sm:$0xf]
  %v500 = vld [vmem:[%s4 + $0x20] sm:$0xf]
  %v501 = vld [vmem:[%s4 + $0x24] sm:$0xf]
  %v502 = vld [vmem:[%s4 + $0x28] sm:$0xf]
  %v503 = vld [vmem:[%s4 + $0x2c] sm:$0xf]
  %v504 = vld [vmem:[%s4 + $0x30] sm:$0xf]
  %v505 = vld [vmem:[%s4 + $0x34] sm:$0xf]
  %v506 = vld [vmem:[%s4 + $0x38] sm:$0xf]
  %v507 = vld [vmem:[%s4 + $0x3c] sm:$0xf]
  %v508 = vld [vmem:[%s5] sm:$0x1]
  %v510 = vlaneseq
  %v511 = vshrl.u32 %v510, 7
  %v512 = vsub.s32 0, %v511
  %v513 = vrot.slane %v508, %v512
  %v531 = vunpack.c.l.b16 %v492
  %v532 = vunpack.c.l.b16 %v493
  %v533 = vunpack.c.l.b16 %v494
  %v534 = vunpack.c.l.b16 %v495
  %v535 = vunpack.c.l.b16 %v496
  %v536 = vunpack.c.l.b16 %v497
  %v537 = vunpack.c.l.b16 %v498
  %v538 = vunpack.c.l.b16 %v499
  %v539 = vunpack.c.l.b16 %v500
  %v540 = vunpack.c.l.b16 %v501
  %v541 = vunpack.c.l.b16 %v502
  %v542 = vunpack.c.l.b16 %v503
  %v543 = vunpack.c.l.b16 %v504
  %v544 = vunpack.c.l.b16 %v505
  %v545 = vunpack.c.l.b16 %v506
  %v546 = vunpack.c.l.b16 %v507
  %v547 = vpack.c.b16 %v532, %v531
  %v548 = vpack.c.b16 %v534, %v533
  %v549 = vpack.c.b16 %v536, %v535
  %v550 = vpack.c.b16 %v538, %v537
  %v551 = vpack.c.b16 %v540, %v539
  %v552 = vpack.c.b16 %v542, %v541
  %v553 = vpack.c.b16 %v544, %v543
  %v554 = vpack.c.b16 %v546, %v545
  %563 = vmatprep.subr.bf16.mxu0 0
  %564 = vmatpush1.bf16.msra.mxu0 %v554
  %565 = vmatprep.subr.bf16.mxu0 0
  %566 = vmatpush1.bf16.msra.mxu0 %v553
  %567 = vmatprep.subr.bf16.mxu0 0
  %568 = vmatpush1.bf16.msra.mxu0 %v552
  %569 = vmatprep.subr.bf16.mxu0 0
  %570 = vmatpush1.bf16.msra.mxu0 %v551
  %571 = vmatprep.subr.bf16.mxu0 0
  %572 = vmatpush1.bf16.msra.mxu0 %v550
  %573 = vmatprep.subr.bf16.mxu0 0
  %574 = vmatpush1.bf16.msra.mxu0 %v549
  %575 = vmatprep.subr.bf16.mxu0 0
  %576 = vmatpush1.bf16.msra.mxu0 %v548
  %577 = vmatprep.subr.bf16.mxu0 0
  %578 = vmatpush1.bf16.msra.mxu0 %v547
  %579 = vmatprep.subr.bf16.mxu0 0
  %580 = vmatpush2.bf16.msra.mxu0 0
  %581 = vmatprep.subr.bf16.mxu0 0
  %582 = vmatpush2.bf16.msra.mxu0 0
  %583 = vmatprep.subr.bf16.mxu0 0
  %584 = vmatpush2.bf16.msra.mxu0 0
  %585 = vmatprep.subr.bf16.mxu0 0
  %586 = vmatpush2.bf16.msra.mxu0 0
  %587 = vmatprep.subr.bf16.mxu0 0
  %588 = vmatpush2.bf16.msra.mxu0 0
  %589 = vmatprep.subr.bf16.mxu0 0
  %590 = vmatpush2.bf16.msra.mxu0 0
  %591 = vmatprep.subr.bf16.mxu0 0
  %592 = vmatpush2.bf16.msra.mxu0 0
  %593 = vmatprep.subr.bf16.mxu0 0
  %594 = vmatpush2.bf16.msra.mxu0 0
  %595 = vmatprep.mubr.bf16.mxu0 0
  %596 = vmatmul.mubr.bf16.gmra.mxu0 %v491
  %v597 = vpop.f32.mrf.mxu0
  %v598 = vadd.f32 %v513, %v597
  %v599 = vpop.f32.mrf.mxu0
  %v600 = vpop.f32.mrf.mxu0
  %v601 = vpop.f32.mrf.mxu0
  %602 = vdwg.mxu0
  %v603 = vmul.f32 %v598, %v598
  %v604 = vmul.f32 %v598, %v603
  %v605 = vmul.f32 %v604, 0.044715
  %v606 = vadd.f32 %v598, %v605
  %v607 = vmul.f32 %v606, 0.7978846
  %v608 = vtanh.pop %v607
  %v609 = vadd.f32 %v608, 1.0
  %v610 = vmul.f32 %v609, 0.5
  %v611 = vmul.f32 %v598, %v610
  %v612 = vpack.c.bf16 %v611, %v611
  %v613 = vld [vmem:[%s6] sm:$0xf]
  %v614 = vld [vmem:[%s6 + $0x4] sm:$0xf]
  %v615 = vld [vmem:[%s6 + $0x8] sm:$0xf]
  %v616 = vld [vmem:[%s6 + $0xc] sm:$0xf]
  %v617 = vld [vmem:[%s6 + $0x10] sm:$0xf]
  %v618 = vld [vmem:[%s6 + $0x14] sm:$0xf]
  %v619 = vld [vmem:[%s6 + $0x18] sm:$0xf]
  %v620 = vld [vmem:[%s6 + $0x1c] sm:$0xf]
  %v621 = vld [vmem:[%s7] sm:$0x1]
  %v623 = vlaneseq
  %v624 = vshrl.u32 %v623, 7
  %v625 = vsub.s32 0, %v624
  %v626 = vrot.slane %v621, %v625
  %v628 = vmul.f32 %v474, %v626
  %v629 = vld [vmem:[%s8] sm:$0x1]
  %v631 = vlaneseq
  %v632 = vshrl.u32 %v631, 7
  %v633 = vsub.s32 0, %v632
  %v634 = vrot.slane %v629, %v633
  %v636 = vadd.f32 %v628, %v634
  %v637 = vpack.c.bf16 %v636, %v636
  %v638 = vld [vmem:[%s9] sm:$0xf]
  %v639 = vld [vmem:[%s9 + $0x4] sm:$0xf]
  %v640 = vld [vmem:[%s9 + $0x8] sm:$0xf]
  %v641 = vld [vmem:[%s9 + $0xc] sm:$0xf]
  %v642 = vld [vmem:[%s9 + $0x10] sm:$0xf]
  %v643 = vld [vmem:[%s9 + $0x14] sm:$0xf]
  %v644 = vld [vmem:[%s9 + $0x18] sm:$0xf]
  %v645 = vld [vmem:[%s9 + $0x1c] sm:$0xf]
  %v646 = vld [vmem:[%s9 + $0x20] sm:$0xf]
  %v647 = vld [vmem:[%s9 + $0x24] sm:$0xf]
  %v648 = vld [vmem:[%s9 + $0x28] sm:$0xf]
  %v649 = vld [vmem:[%s9 + $0x2c] sm:$0xf]
  %v650 = vld [vmem:[%s9 + $0x30] sm:$0xf]
  %v651 = vld [vmem:[%s9 + $0x34] sm:$0xf]
  %v652 = vld [vmem:[%s9 + $0x38] sm:$0xf]
  %v653 = vld [vmem:[%s9 + $0x3c] sm:$0xf]
  %v654 = vld [vmem:[%s10] sm:$0x1]
  %v656 = vlaneseq
  %v657 = vshrl.u32 %v656, 7
  %v658 = vsub.s32 0, %v657
  %v659 = vrot.slane %v654, %v658
  %v677 = vunpack.c.l.b16 %v638
  %v678 = vunpack.c.l.b16 %v639
  %v679 = vunpack.c.l.b16 %v640
  %v680 = vunpack.c.l.b16 %v641
  %v681 = vunpack.c.l.b16 %v642
  %v682 = vunpack.c.l.b16 %v643
  %v683 = vunpack.c.l.b16 %v644
  %v684 = vunpack.c.l.b16 %v645
  %v685 = vunpack.c.l.b16 %v646
  %v686 = vunpack.c.l.b16 %v647
  %v687 = vunpack.c.l.b16 %v648
  %v688 = vunpack.c.l.b16 %v649
  %v689 = vunpack.c.l.b16 %v650
  %v690 = vunpack.c.l.b16 %v651
  %v691 = vunpack.c.l.b16 %v652
  %v692 = vunpack.c.l.b16 %v653
  %v693 = vpack.c.b16 %v678, %v677
  %v694 = vpack.c.b16 %v680, %v679
  %v695 = vpack.c.b16 %v682, %v681
  %v696 = vpack.c.b16 %v684, %v683
  %v697 = vpack.c.b16 %v686, %v685
  %v698 = vpack.c.b16 %v688, %v687
  %v699 = vpack.c.b16 %v690, %v689
  %v700 = vpack.c.b16 %v692, %v691
  %709 = vmatprep.subr.bf16.mxu0 0
  %710 = vmatpush1.bf16.msra.mxu0 %v700
  %711 = vmatprep.subr.bf16.mxu0 0
  %712 = vmatpush1.bf16.msra.mxu0 %v699
  %713 = vmatprep.subr.bf16.mxu0 0
  %714 = vmatpush1.bf16.msra.mxu0 %v698
  %715 = vmatprep.subr.bf16.mxu0 0
  %716 = vmatpush1.bf16.msra.mxu0 %v697
  %717 = vmatprep.subr.bf16.mxu0 0
  %718 = vmatpush1.bf16.msra.mxu0 %v696
  %719 = vmatprep.subr.bf16.mxu0 0
  %720 = vmatpush1.bf16.msra.mxu0 %v695
  %721 = vmatprep.subr.bf16.mxu0 0
  %722 = vmatpush1.bf16.msra.mxu0 %v694
  %723 = vmatprep.subr.bf16.mxu0 0
  %724 = vmatpush1.bf16.msra.mxu0 %v693
  %725 = vmatprep.subr.bf16.mxu0 0
  %726 = vmatpush2.bf16.msra.mxu0 0
  %727 = vmatprep.subr.bf16.mxu0 0
  %728 = vmatpush2.bf16.msra.mxu0 0
  %729 = vmatprep.subr.bf16.mxu0 0
  %730 = vmatpush2.bf16.msra.mxu0 0
  %731 = vmatprep.subr.bf16.mxu0 0
  %732 = vmatpush2.bf16.msra.mxu0 0
  %733 = vmatprep.subr.bf16.mxu0 0
  %734 = vmatpush2.bf16.msra.mxu0 0
  %735 = vmatprep.subr.bf16.mxu0 0
  %736 = vmatpush2.bf16.msra.mxu0 0
  %737 = vmatprep.subr.bf16.mxu0 0
  %738 = vmatpush2.bf16.msra.mxu0 0
  %739 = vmatprep.subr.bf16.mxu0 0
  %740 = vmatpush2.bf16.msra.mxu0 0
  %741 = vmatprep.mubr.bf16.mxu0 0
  %742 = vmatmul.mubr.bf16.gmra.mxu0 %v637
  %v743 = vpop.f32.mrf.mxu0
  %v744 = vadd.f32 %v659, %v743
  %v745 = vpop.f32.mrf.mxu0
  %v746 = vpop.f32.mrf.mxu0
  %v747 = vpop.f32.mrf.mxu0
  %748 = vdwg.mxu0
  %v749 = vmul.f32 %v744, %v744
  %v750 = vmul.f32 %v744, %v749
  %v751 = vmul.f32 %v750, 0.044715
  %v752 = vadd.f32 %v744, %v751
  %v753 = vmul.f32 %v752, 0.7978846
  %v754 = vtanh.pop %v753
  %v755 = vadd.f32 %v754, 1.0
  %v756 = vmul.f32 %v755, 0.5
  %v757 = vmul.f32 %v744, %v756
  %v758 = vpack.c.bf16 %v757, %v757
  %v759 = vld [vmem:[%s11] sm:$0xf]
  %v760 = vld [vmem:[%s11 + $0x4] sm:$0xf]
  %v761 = vld [vmem:[%s11 + $0x8] sm:$0xf]
  %v762 = vld [vmem:[%s11 + $0xc] sm:$0xf]
  %v763 = vld [vmem:[%s11 + $0x10] sm:$0xf]
  %v764 = vld [vmem:[%s11 + $0x14] sm:$0xf]
  %v765 = vld [vmem:[%s11 + $0x18] sm:$0xf]
  %v766 = vld [vmem:[%s11 + $0x1c] sm:$0xf]
  %v775 = vunpack.c.l.b16 %v759
  %v776 = vunpack.c.l.b16 %v760
  %v777 = vunpack.c.l.b16 %v761
  %v778 = vunpack.c.l.b16 %v762
  %v779 = vunpack.c.l.b16 %v763
  %v780 = vunpack.c.l.b16 %v764
  %v781 = vunpack.c.l.b16 %v765
  %v782 = vunpack.c.l.b16 %v766
  %v783 = vpack.c.b16 %v776, %v775
  %v784 = vpack.c.b16 %v778, %v777
  %v785 = vpack.c.b16 %v780, %v779
  %v786 = vpack.c.b16 %v782, %v781
  %vm791 = vcmask 523264
  %v793 = vsel %vm791, %v758, 0
  %795 = vmatprep.subr.bf16.mxu0 0
  %796 = vmatpush1.bf16.msra.mxu0 0
  %797 = vmatprep.subr.bf16.mxu0 0
  %798 = vmatpush1.bf16.msra.mxu0 0
  %799 = vmatprep.subr.bf16.mxu0 0
  %800 = vmatpush1.bf16.msra.mxu0 0
  %801 = vmatprep.subr.bf16.mxu0 0
  %802 = vmatpush1.bf16.msra.mxu0 0
  %803 = vmatprep.subr.bf16.mxu0 0
  %804 = vmatpush1.bf16.msra.mxu0 %v786
  %805 = vmatprep.subr.bf16.mxu0 0
  %806 = vmatpush1.bf16.msra.mxu0 %v785
  %807 = vmatprep.subr.bf16.mxu0 0
  %808 = vmatpush1.bf16.msra.mxu0 %v784
  %809 = vmatprep.subr.bf16.mxu0 0
  %810 = vmatpush1.bf16.msra.mxu0 %v783
  %811 = vmatprep.subr.bf16.mxu0 0
  %812 = vmatpush2.bf16.msra.mxu0 0
  %813 = vmatprep.subr.bf16.mxu0 0
  %814 = vmatpush2.bf16.msra.mxu0 0
  %815 = vmatprep.subr.bf16.mxu0 0
  %816 = vmatpush2.bf16.msra.mxu0 0
  %817 = vmatprep.subr.bf16.mxu0 0
  %818 = vmatpush2.bf16.msra.mxu0 0
  %819 = vmatprep.subr.bf16.mxu0 0
  %820 = vmatpush2.bf16.msra.mxu0 0
  %821 = vmatprep.subr.bf16.mxu0 0
  %822 = vmatpush2.bf16.msra.mxu0 0
  %823 = vmatprep.subr.bf16.mxu0 0
  %824 = vmatpush2.bf16.msra.mxu0 0
  %825 = vmatprep.subr.bf16.mxu0 0
  %826 = vmatpush2.bf16.msra.mxu0 0
  %827 = vmatprep.mubr.bf16.mxu0 0
  %828 = vmatmul.mubr.bf16.gmra.mxu0 %v793
  %v829 = vpop.f32.mrf.mxu0
  %v830 = vadd.f32 0.0, %v829
  %v831 = vpop.f32.mrf.mxu0
  %v832 = vpop.f32.mrf.mxu0
  %v833 = vpop.f32.mrf.mxu0
  %834 = vdwg.mxu0
  %v843 = vunpack.c.l.b16 %v613
  %v844 = vunpack.c.l.b16 %v614
  %v845 = vunpack.c.l.b16 %v615
  %v846 = vunpack.c.l.b16 %v616
  %v847 = vunpack.c.l.b16 %v617
  %v848 = vunpack.c.l.b16 %v618
  %v849 = vunpack.c.l.b16 %v619
  %v850 = vunpack.c.l.b16 %v620
  %v851 = vpack.c.b16 %v844, %v843
  %v852 = vpack.c.b16 %v846, %v845
  %v853 = vpack.c.b16 %v848, %v847
  %v854 = vpack.c.b16 %v850, %v849
  %v860 = vsel %vm791, %v612, 0
  %862 = vmatprep.subr.bf16.mxu0 0
  %863 = vmatpush1.bf16.msra.mxu0 0
  %864 = vmatprep.subr.bf16.mxu0 0
  %865 = vmatpush1.bf16.msra.mxu0 0
  %866 = vmatprep.subr.bf16.mxu0 0
  %867 = vmatpush1.bf16.msra.mxu0 0
  %868 = vmatprep.subr.bf16.mxu0 0
  %869 = vmatpush1.bf16.msra.mxu0 0
  %870 = vmatprep.subr.bf16.mxu0 0
  %871 = vmatpush1.bf16.msra.mxu0 %v854
  %872 = vmatprep.subr.bf16.mxu0 0
  %873 = vmatpush1.bf16.msra.mxu0 %v853
  %874 = vmatprep.subr.bf16.mxu0 0
  %875 = vmatpush1.bf16.msra.mxu0 %v852
  %876 = vmatprep.subr.bf16.mxu0 0
  %877 = vmatpush1.bf16.msra.mxu0 %v851
  %878 = vmatprep.subr.bf16.mxu0 0
  %879 = vmatpush2.bf16.msra.mxu0 0
  %880 = vmatprep.subr.bf16.mxu0 0
  %881 = vmatpush2.bf16.msra.mxu0 0
  %882 = vmatprep.subr.bf16.mxu0 0
  %883 = vmatpush2.bf16.msra.mxu0 0
  %884 = vmatprep.subr.bf16.mxu0 0
  %885 = vmatpush2.bf16.msra.mxu0 0
  %886 = vmatprep.subr.bf16.mxu0 0
  %887 = vmatpush2.bf16.msra.mxu0 0
  %888 = vmatprep.subr.bf16.mxu0 0
  %889 = vmatpush2.bf16.msra.mxu0 0
  %890 = vmatprep.subr.bf16.mxu0 0
  %891 = vmatpush2.bf16.msra.mxu0 0
  %892 = vmatprep.subr.bf16.mxu0 0
  %893 = vmatpush2.bf16.msra.mxu0 0
  %894 = vmatprep.mubr.bf16.mxu0 0
  %895 = vmatmul.mubr.bf16.gmra.mxu0 %v860
  %v896 = vpop.f32.mrf.mxu0
  %v897 = vadd.f32 %v830, %v896
  %v898 = vpop.f32.mrf.mxu0
  %v899 = vpop.f32.mrf.mxu0
  %v900 = vpop.f32.mrf.mxu0
  %901 = vdwg.mxu0
  %v902 = vld [vmem:[%s12] sm:$0x1]
  %v904 = vlaneseq
  %v905 = vshrl.u32 %v904, 7
  %v906 = vsub.s32 0, %v905
  %v907 = vrot.slane %v902, %v906
  %v909 = vadd.f32 %v897, %v907
  %910 = vst [vmem:[%s13] sm:$0xff] %v909
  // Predicated region
  $region286: #{core_personality_forward.1} parent=0 // pred_check
    _
  $region287: #{core_personality_forward.1} parent=0 // pred_check_branch
    %912 = sbr.rel (0) target = $region289
  $region288: #{core_personality_forward.1} parent=0 // pred_region
    _
  $region289: #{core_personality_forward.1} parent=0 // pred_fallthru
    _
  // Predicated region
  $region290: #{core_personality_forward.1} parent=0 // pred_check
    _
  $region291: #{core_personality_forward.1} parent=0 // pred_check_branch
    %914 = sbr.rel (0) target = $region293
  $region292: #{core_personality_forward.1} parent=0 // pred_region
    _
  $region293: #{core_personality_forward.1} parent=0 // pred_fallthru
    _
  %915 = vsyncmov [#allocation3]
  %s916 = vpop.sfrf %915
  %p917 = scmp.eq.s32.totalorder %s916, 0
  %p918 = pneg %p917
  %920 = shalt.err (%p918)
  %s921 = scalar_lea.sflag [#allocation3], 1
  %922 = vsyncmov %s921
  %s923 = vpop.sfrf %922
  %p924 = scmp.eq.s32.totalorder %s923, 0
  %p925 = pneg %p924
  %927 = shalt.err (%p925)
  %s928 = scalar_lea.sflag [#allocation3], 2
  %929 = vsyncmov %s928
  %s930 = vpop.sfrf %929
  %p931 = scmp.eq.s32.totalorder %s930, 0
  %p932 = pneg %p931
  %934 = shalt.err (%p932)
  %s935 = scalar_lea.sflag [#allocation3], 3
  %936 = vsyncmov %s935
  %s937 = vpop.sfrf %936
  %p938 = scmp.eq.s32.totalorder %s937, 0
  %p939 = pneg %p938
  %941 = shalt.err (%p939)
  %s942 = scalar_lea.sflag [#allocation3], 4
  %943 = vsyncmov %s942
  %s944 = vpop.sfrf %943
  %p945 = scmp.eq.s32.totalorder %s944, 0
  %p946 = pneg %p945
  %948 = shalt.err (%p946)
  %s949 = scalar_lea.sflag [#allocation3], 5
  %950 = vsyncmov %s949
  %s951 = vpop.sfrf %950
  %p952 = scmp.eq.s32.totalorder %s951, 0
  %p953 = pneg %p952
  %955 = shalt.err (%p953)
  %s956 = scalar_lea.sflag [#allocation3], 6
  %957 = vsyncmov %s956
  %s958 = vpop.sfrf %957
  %p959 = scmp.eq.s32.totalorder %s958, 0
  %p960 = pneg %p959
  %962 = shalt.err (%p960)
  %s963 = scalar_lea.sflag [#allocation3], 7
  %964 = vsyncmov %s963
  %s965 = vpop.sfrf %964
  %p966 = scmp.eq.s32.totalorder %s965, 0
  %p967 = pneg %p966
  %969 = shalt.err (%p967)

</llo_original>
